<compile_context>
chip_gen: v5e
topology: v5e:2x2
jax: 0.10.0
libtpu: 0.0.40
codegen_flags: <defaults>
</compile_context>

<pallas_src>
import math
from functools import partial

import numpy as np
import jax
import jax.numpy as jnp
from jax.experimental import pallas as pl
from jax.experimental.pallas import tpu as pltpu

LN_EPS = 1e-5


# ----------------------------- Pallas kernels -----------------------------

def _full_spec(shape):
    """Full-extent resident block (weights / biases)."""
    n = len(shape)
    return pl.BlockSpec(shape, lambda *_: (0,) * n)


def _pick_row_tile(R, target=512):
    """Largest divisor of R that is a multiple of 8 and <= target; else R."""
    for t in range(min(R, target), 0, -1):
        if R % t == 0 and t % 8 == 0:
            return t
    return R


def _pick_batch_tile(B, S, K, target_rows=4096):
    """Batch tile for the fused (last) stage: divides B, multiple of 8 if possible."""
    cap = max(1, target_rows // max(1, S * K))
    for t in range(min(B, cap), 0, -1):
        if B % t == 0 and t % 8 == 0:
            return t
    return B


def _stage_kernel(local_ref, anchor_ref, wd_ref, bd_ref, wa1_ref, wa2_ref,
                  ba_ref, gamma_ref, beta_ref, out_ref):
    # local: [K, tile_R, D]   anchor: [tile_R, D]   out: [tile_R, C]
    K = local_ref.shape[0]
    anchor = anchor_ref[...]                                   # f32
    wd, bd = wd_ref[...], bd_ref[...]                          # wd bf16, bd f32
    wa1, wa2, ba = wa1_ref[...], wa2_ref[...], ba_ref[...]
    gamma, beta = gamma_ref[...], beta_ref[...]

    # anchor term of the agg projector is the same for every neighbor -> hoist.
    a_term = jnp.dot(anchor.astype(jnp.bfloat16), wa2,
                     preferred_element_type=jnp.float32) + ba   # [tile_R, C]

    acc = jnp.zeros(out_ref.shape, jnp.float32)
    for k in range(K):                                          # unrolled, K small
        diff = (local_ref[k] - anchor).astype(jnp.bfloat16)     # diff in f32, cast at dot
        diffp = jnp.dot(diff, wd, preferred_element_type=jnp.float32) + bd
        h = jnp.dot(diffp.astype(jnp.bfloat16), wa1,
                    preferred_element_type=jnp.float32) + a_term
        h = jnp.maximum(h, 0.0)                                 # ReLU
        mu = jnp.mean(h, axis=-1, keepdims=True)                # LayerNorm over channels
        var = jnp.mean((h - mu) ** 2, axis=-1, keepdims=True)
        acc = acc + (h - mu) * jax.lax.rsqrt(var + LN_EPS) * gamma + beta
    out_ref[...] = acc * (1.0 / K)                              # AvgPool1d over K neighbors


def _stage_head_kernel(local_ref, anchor_ref, wd_ref, bd_ref, wa1_ref, wa2_ref,
                       ba_ref, gamma_ref, beta_ref, wflat_ref, bflat_ref,
                       wdim_ref, bdim_ref, out_ref):
    # Last stage fused with flatten_projector + dim_projector.
    # local: [K, S, tile_B, D]   anchor: [S, tile_B, D]   out: [tile_B, out_dim]
    K, S, tile_b = local_ref.shape[0], local_ref.shape[1], local_ref.shape[2]
    C = wa1_ref.shape[1]
    wd, bd = wd_ref[...], bd_ref[...]
    wa1, wa2, ba = wa1_ref[...], wa2_ref[...], ba_ref[...]
    gamma, beta = gamma_ref[...], beta_ref[...]

    inv_k = 1.0 / K
    head1 = jnp.zeros((tile_b, C), jnp.float32)
    for s in range(S):                                          # unrolled, S small
        anchor = anchor_ref[s]                                  # [tile_B, D] f32
        a_term = jnp.dot(anchor.astype(jnp.bfloat16), wa2,
                         preferred_element_type=jnp.float32) + ba
        acc = jnp.zeros((tile_b, C), jnp.float32)
        for k in range(K):
            diff = (local_ref[k, s] - anchor).astype(jnp.bfloat16)
            diffp = jnp.dot(diff, wd, preferred_element_type=jnp.float32) + bd
            h = jnp.dot(diffp.astype(jnp.bfloat16), wa1,
                        preferred_element_type=jnp.float32) + a_term
            h = jnp.maximum(h, 0.0)
            mu = jnp.mean(h, axis=-1, keepdims=True)
            var = jnp.mean((h - mu) ** 2, axis=-1, keepdims=True)
            acc = acc + (h - mu) * jax.lax.rsqrt(var + LN_EPS) * gamma + beta
        pooled_s = (acc * inv_k).astype(jnp.bfloat16)           # [tile_B, C]
        # flatten_projector: x.flatten(1) @ w_flat == sum_s pooled_s @ w_flat[s*C:(s+1)*C]
        head1 = head1 + jnp.dot(pooled_s, wflat_ref[s * C:(s + 1) * C, :],
                                preferred_element_type=jnp.float32)
    h2 = head1 + bflat_ref[...]
    out_ref[...] = jnp.dot(h2.astype(jnp.bfloat16), wdim_ref[...],
                           preferred_element_type=jnp.float32) + bdim_ref[...]


def pallas_stage(local_krd, anchor_rd, sp):
    K, R, D = local_krd.shape
    C = sp["wa1"].shape[1]
    tile_r = _pick_row_tile(R)
    wd = sp["wd"].astype(jnp.bfloat16)
    wa1 = sp["wa1"].astype(jnp.bfloat16)
    wa2 = sp["wa2"].astype(jnp.bfloat16)
    return pl.pallas_call(
        _stage_kernel,
        out_shape=jax.ShapeDtypeStruct((R, C), jnp.float32),
        grid=(R // tile_r,),
        in_specs=[
            pl.BlockSpec((K, tile_r, D), lambda i: (0, i, 0)),
            pl.BlockSpec((tile_r, D), lambda i: (i, 0)),
            _full_spec(wd.shape), _full_spec(sp["bd"].shape),
            _full_spec(wa1.shape), _full_spec(wa2.shape), _full_spec(sp["ba"].shape),
            _full_spec(sp["gamma"].shape), _full_spec(sp["beta"].shape),
        ],
        out_specs=pl.BlockSpec((tile_r, C), lambda i: (i, 0)),
        compiler_params=pltpu.CompilerParams(dimension_semantics=("parallel",)),
    )(local_krd, anchor_rd, wd, sp["bd"], wa1, wa2, sp["ba"], sp["gamma"], sp["beta"])


def pallas_stage_head(local_ksbd, anchor_sbd, sp, hp):
    K, S, B, D = local_ksbd.shape
    out_dim = hp["w_dim"].shape[1]
    tile_b = _pick_batch_tile(B, S, K)
    wd = sp["wd"].astype(jnp.bfloat16)
    wa1 = sp["wa1"].astype(jnp.bfloat16)
    wa2 = sp["wa2"].astype(jnp.bfloat16)
    wflat = hp["w_flat"].astype(jnp.bfloat16)
    wdim = hp["w_dim"].astype(jnp.bfloat16)
    return pl.pallas_call(
        _stage_head_kernel,
        out_shape=jax.ShapeDtypeStruct((B, out_dim), jnp.float32),
        grid=(B // tile_b,),
        in_specs=[
            pl.BlockSpec((K, S, tile_b, D), lambda i: (0, 0, i, 0)),
            pl.BlockSpec((S, tile_b, D), lambda i: (0, i, 0)),
            _full_spec(wd.shape), _full_spec(sp["bd"].shape),
            _full_spec(wa1.shape), _full_spec(wa2.shape), _full_spec(sp["ba"].shape),
            _full_spec(sp["gamma"].shape), _full_spec(sp["beta"].shape),
            _full_spec(wflat.shape), _full_spec(hp["b_flat"].shape),
            _full_spec(wdim.shape), _full_spec(hp["b_dim"].shape),
        ],
        out_specs=pl.BlockSpec((tile_b, out_dim), lambda i: (i, 0)),
        compiler_params=pltpu.CompilerParams(dimension_semantics=("parallel",)),
    )(local_ksbd, anchor_sbd, wd, sp["bd"], wa1, wa2, sp["ba"], sp["gamma"], sp["beta"],
      wflat, hp["b_flat"], wdim, hp["b_dim"])


# ----------------------------- JAX glue (fused by XLA) -----------------------------

def square_distance(src, dst):
    # src [B,S,2], dst [B,N,2] -> [B,S,N]; tiny op, XLA fuses it (no Pallas call).
    diff = src[:, :, None, :] - dst[:, None, :, :]
    return jnp.sum(diff * diff, axis=-1)


def farthest_point_sample(xyz, npoint, init_farthest):
    # TODO(synk): sequential data-dependent argmax loop has no clean Pallas form; kept in JAX.
    B, N, _ = xyz.shape

    def body(i, carry):
        centroids, distance, farthest = carry
        centroids = centroids.at[:, i].set(farthest)
        centroid = xyz[jnp.arange(B), farthest][:, None, :]        # [B, 1, 2]
        dist = jnp.sum((xyz - centroid) ** 2, axis=-1)             # [B, N]
        distance = jnp.minimum(distance, dist)
        farthest = jnp.argmax(distance, axis=-1).astype(jnp.int32)
        return centroids, distance, farthest

    centroids = jnp.zeros((B, npoint), jnp.int32)
    distance = jnp.full((B, N), 1e10, jnp.float32)
    centroids, _, _ = jax.lax.fori_loop(0, npoint, body,
                                        (centroids, distance, init_farthest))
    return centroids


def index_points(points, idx):
    # points: [B, N, C]; idx: [B, S] or [B, S, K]
    return jax.vmap(lambda p, i: p[i])(points, idx)


def _group(all_points, all_points_fea, init_far, S, K):
    # FPS -> KNN -> gather; kept in XLA.
    # TODO(synk): the KNN gather could be moved in-kernel via scalar-prefetched idx
    # + pl.Element row gather to avoid materializing `local` in HBM.
    fps_idx = farthest_point_sample(all_points, S, init_far)       # [B, S]
    new_points = index_points(all_points, fps_idx)                 # [B, S, 2]
    new_points_fea = index_points(all_points_fea, fps_idx)         # [B, S, C]
    sqd = square_distance(new_points, all_points)                  # [B, S, N]
    _, idx = jax.lax.top_k(-sqd, K)                                # [B, S, K]
    grouped_points = index_points(all_points, idx)                 # [B, S, K, 2]
    grouped_fea = index_points(all_points_fea, idx)                # [B, S, K, C]
    local = jnp.concatenate([grouped_fea, grouped_points], axis=-1)       # [B,S,K,D]
    anchor = jnp.concatenate([new_points_fea, new_points], axis=-1)       # [B,S,D]
    return new_points, local, anchor


@partial(jax.jit, static_argnames=("S", "K"))
def _stage_step(all_points, all_points_fea, init_far, sp, *, S, K):
    B = all_points.shape[0]
    new_points, local, anchor = _group(all_points, all_points_fea, init_far, S, K)
    D = local.shape[-1]
    R = B * S
    local_krd = jnp.transpose(local, (2, 0, 1, 3)).reshape(K, R, D)   # neighbors leading
    anchor_rd = anchor.reshape(R, D)
    pooled = pallas_stage(local_krd, anchor_rd, sp)                   # [R, C]
    return new_points, pooled.reshape(B, S, -1)


@partial(jax.jit, static_argnames=("S", "K"))
def _final_stage_step(all_points, all_points_fea, init_far, sp, hp, *, S, K):
    new_points, local, anchor = _group(all_points, all_points_fea, init_far, S, K)
    local_ksbd = jnp.transpose(local, (2, 1, 0, 3))                   # [K, S, B, D]
    anchor_sbd = jnp.transpose(anchor, (1, 0, 2))                     # [S, B, D]
    return pallas_stage_head(local_ksbd, anchor_sbd, sp, hp)          # [B, out_dim]


# ----------------------------- host-side glue -----------------------------

def rand_sample_repeat_np(x, max_len, rng):
    n = x.shape[0]
    if n < max_len:
        extra = rng.randint(0, n, size=(max_len - n,))
        return np.concatenate([x, x[extra]], axis=0)
    elif n == max_len:
        return x
    else:
        perm = rng.permutation(n)[:max_len]
        return x[perm]


def bilinear_point_sample(fmap_chw, coords_xy):
    # TODO(synk): data-dependent gather (F.grid_sample, align_corners=True) kept in JAX glue.
    C, H, W = fmap_chw.shape
    x = coords_xy[:, 0] * (W - 1)
    y = coords_xy[:, 1] * (H - 1)
    x0 = jnp.floor(x)
    y0 = jnp.floor(y)
    wx1 = x - x0
    wy1 = y - y0
    wx0 = 1.0 - wx1
    wy0 = 1.0 - wy1
    x0i = jnp.clip(x0, 0, W - 1).astype(jnp.int32)
    x1i = jnp.clip(x0 + 1, 0, W - 1).astype(jnp.int32)
    y0i = jnp.clip(y0, 0, H - 1).astype(jnp.int32)
    y1i = jnp.clip(y0 + 1, 0, H - 1).astype(jnp.int32)
    v00 = fmap_chw[:, y0i, x0i]
    v01 = fmap_chw[:, y0i, x1i]
    v10 = fmap_chw[:, y1i, x0i]
    v11 = fmap_chw[:, y1i, x1i]
    out = (v00 * (wy0 * wx0) + v01 * (wy0 * wx1)
           + v10 * (wy1 * wx0) + v11 * (wy1 * wx1))   # [C, P]
    return out.T                                      # [P, C]


def init_params(key, input_dim, output_dim, num_sub_point):
    D = input_dim + 2
    params = {"stages": []}
    for _ in num_sub_point:
        key, k0, k1, k2, k3, k4 = jax.random.split(key, 6)
        params["stages"].append({
            "wd": jax.random.normal(k0, (D, D), jnp.float32) * 0.05,
            "bd": jax.random.normal(k1, (1, D), jnp.float32) * 0.05,
            "wa1": jax.random.normal(k2, (D, input_dim), jnp.float32) * 0.05,
            "wa2": jax.random.normal(k3, (D, input_dim), jnp.float32) * 0.05,
            "ba": jax.random.normal(k4, (1, input_dim), jnp.float32) * 0.05,
            "gamma": jnp.ones((1, input_dim), jnp.float32),   # LayerNorm default init
            "beta": jnp.zeros((1, input_dim), jnp.float32),
        })
    key, k1, k2, k3, k4 = jax.random.split(key, 5)
    params["head"] = {
        "w_flat": jax.random.normal(k1, (input_dim * num_sub_point[-1], input_dim),
                                    jnp.float32) * 0.05,
        "b_flat": jax.random.normal(k2, (1, input_dim), jnp.float32) * 0.05,
        "w_dim": jax.random.normal(k3, (input_dim, output_dim), jnp.float32) * 0.05,
        "b_dim": jax.random.normal(k4, (1, output_dim), jnp.float32) * 0.05,
    }
    return params


def geo_region_sampler_forward(params, feature_map, region_masks,
                               num_init_point, num_sub_point, num_neighbor, np_rng):
    assert len(feature_map) == len(region_masks)
    all_points, all_points_fea, all_points_img_ids = [], [], []

    for img_idx, (fmap_i, masks_i) in enumerate(zip(feature_map, region_masks)):
        if len(masks_i) == 0:
            continue
        H_img, W_img = masks_i[0].shape
        wh = np.array([H_img, W_img], dtype=np.float32)
        pts = []
        for m in masks_i:
            nz = np.stack(np.nonzero(np.asarray(m)), axis=-1).astype(np.float32)  # (row, col)
            pts.append(rand_sample_repeat_np(nz / wh, num_init_point, np_rng))
        pts = jnp.asarray(np.stack(pts, axis=0), jnp.float32)          # [nm, P, 2]

        hw = int(math.sqrt(fmap_i.shape[0]))
        c = fmap_i.shape[-1]
        fmap_chw = fmap_i.reshape(hw, hw, c).transpose(2, 0, 1)        # [C, H, W]
        coords_xy = pts[..., ::-1]                                     # flip -> (x, y)
        fea = jax.vmap(lambda co: bilinear_point_sample(fmap_chw, co))(coords_xy)  # [nm, P, C]

        all_points.append(pts)
        all_points_fea.append(fea)
        all_points_img_ids.extend([img_idx] * pts.shape[0])

    if len(all_points) == 0:
        return [None] * len(region_masks)

    all_points = jnp.concatenate(all_points, axis=0)          # [B, P, 2]
    all_points_fea = jnp.concatenate(all_points_fea, axis=0)  # [B, P, C]
    all_points_img_ids = np.asarray(all_points_img_ids)

    n_stage = len(num_sub_point)
    all_region_fea = None
    for stage_i in range(n_stage):
        S = num_sub_point[stage_i]
        K = num_neighbor[stage_i]
        B, N, _ = all_points.shape
        init_far = jnp.asarray(np_rng.randint(0, N, size=(B,)), jnp.int32)
        sp = params["stages"][stage_i]
        if stage_i == n_stage - 1:
            all_region_fea = _final_stage_step(all_points, all_points_fea, init_far,
                                               sp, params["head"], S=S, K=K)
        else:
            all_points, all_points_fea = _stage_step(all_points, all_points_fea,
                                                     init_far, sp, S=S, K=K)

    output_region_fea = []
    for img_idx in range(len(region_masks)):
        sel = np.nonzero(all_points_img_ids == img_idx)[0]
        if sel.size == 0:
            output_region_fea.append(None)
        else:
            output_region_fea.append(all_region_fea[jnp.asarray(sel)])
    return output_region_fea


# ----------------------------- demo -----------------------------

if __name__ == "__main__":
    input_dim, output_dim = 32, 64
    num_init_point = 32
    num_sub_point = [16, 8]
    num_neighbor = [8, 4]
    h = w = 16                      # feature map spatial size (HW = 256)

    key = jax.random.PRNGKey(0)
    k_param, k_f0, k_f1 = jax.random.split(key, 3)
    params = init_params(k_param, input_dim, output_dim, num_sub_point)

    feature_map = [
        jax.random.normal(k_f0, (h * w, input_dim), jnp.float32),
        jax.random.normal(k_f1, (h * w, input_dim), jnp.float32),
    ]

    np_rng = np.random.RandomState(0)
    H_img = W_img = 24

    def make_mask():
        m = np.zeros((H_img, W_img), np.float32)
        ys = np_rng.randint(0, H_img, size=60)
        xs = np_rng.randint(0, W_img, size=60)
        m[ys, xs] = 1.0
        return m

    # image 0 has 2 region masks, image 1 has 1 region mask
    region_masks = [[make_mask(), make_mask()], [make_mask()]]

    out = geo_region_sampler_forward(params, feature_map, region_masks,
                                     num_init_point, num_sub_point, num_neighbor, np_rng)

    for o in out:
        if o is not None:
            jax.block_until_ready(o)

    assert out[0] is not None and out[0].shape == (2, output_dim)
    assert out[1] is not None and out[1].shape == (1, output_dim)
    assert all(bool(jnp.all(jnp.isfinite(o))) for o in out if o is not None)
    print("KERNEL_OK")
</pallas_src>

<mosaic_0001>
module attributes {stable_mosaic.version = 11 : i64} {
  func.func @_stage_kernel(%arg0: i32, %arg1: memref<8x48x34xf32, #tpu.memory_space<vmem>>, %arg2: memref<48x34xf32, #tpu.memory_space<vmem>>, %arg3: memref<34x34xbf16, #tpu.memory_space<vmem>>, %arg4: memref<1x34xf32, #tpu.memory_space<vmem>>, %arg5: memref<34x32xbf16, #tpu.memory_space<vmem>>, %arg6: memref<34x32xbf16, #tpu.memory_space<vmem>>, %arg7: memref<1x32xf32, #tpu.memory_space<vmem>>, %arg8: memref<1x32xf32, #tpu.memory_space<vmem>>, %arg9: memref<1x32xf32, #tpu.memory_space<vmem>>, %arg10: memref<48x32xf32, #tpu.memory_space<vmem>>) attributes {dimension_semantics = [#tpu.dimension_semantics<parallel>], iteration_bounds = array<i64: 1>, scalar_prefetch = 0 : i64, scratch_operands = 0 : i64, tpu.core_type = #tpu.core_type<tc>, window_params = [{transform_indices = @transform_0, window_bounds = array<i64: 8, 48, 34>}, {transform_indices = @transform_1, window_bounds = array<i64: 48, 34>}, {pipeline_mode = #tpu.pipeline_mode<synchronous>, transform_indices = @transform_2, window_bounds = array<i64: 34, 34>}, {pipeline_mode = #tpu.pipeline_mode<synchronous>, transform_indices = @transform_3, window_bounds = array<i64: 1, 34>}, {pipeline_mode = #tpu.pipeline_mode<synchronous>, transform_indices = @transform_4, window_bounds = array<i64: 34, 32>}, {pipeline_mode = #tpu.pipeline_mode<synchronous>, transform_indices = @transform_5, window_bounds = array<i64: 34, 32>}, {pipeline_mode = #tpu.pipeline_mode<synchronous>, transform_indices = @transform_6, window_bounds = array<i64: 1, 32>}, {pipeline_mode = #tpu.pipeline_mode<synchronous>, transform_indices = @transform_7, window_bounds = array<i64: 1, 32>}, {pipeline_mode = #tpu.pipeline_mode<synchronous>, transform_indices = @transform_8, window_bounds = array<i64: 1, 32>}, {transform_indices = @transform_9, window_bounds = array<i64: 48, 32>}]} {
    %c0 = arith.constant 0 : index
    %c0_0 = arith.constant 0 : index
    %0 = vector.load %arg2[%c0, %c0_0] : memref<48x34xf32, #tpu.memory_space<vmem>>, vector<48x34xf32>
    %c0_1 = arith.constant 0 : index
    %c0_2 = arith.constant 0 : index
    %1 = vector.load %arg3[%c0_1, %c0_2] : memref<34x34xbf16, #tpu.memory_space<vmem>>, vector<34x34xbf16>
    %c0_3 = arith.constant 0 : index
    %c0_4 = arith.constant 0 : index
    %2 = vector.load %arg4[%c0_3, %c0_4] : memref<1x34xf32, #tpu.memory_space<vmem>>, vector<1x34xf32>
    %c0_5 = arith.constant 0 : index
    %c0_6 = arith.constant 0 : index
    %3 = vector.load %arg5[%c0_5, %c0_6] : memref<34x32xbf16, #tpu.memory_space<vmem>>, vector<34x32xbf16>
    %c0_7 = arith.constant 0 : index
    %c0_8 = arith.constant 0 : index
    %4 = vector.load %arg6[%c0_7, %c0_8] : memref<34x32xbf16, #tpu.memory_space<vmem>>, vector<34x32xbf16>
    %c0_9 = arith.constant 0 : index
    %c0_10 = arith.constant 0 : index
    %5 = vector.load %arg7[%c0_9, %c0_10] : memref<1x32xf32, #tpu.memory_space<vmem>>, vector<1x32xf32>
    %c0_11 = arith.constant 0 : index
    %c0_12 = arith.constant 0 : index
    %6 = vector.load %arg8[%c0_11, %c0_12] : memref<1x32xf32, #tpu.memory_space<vmem>>, vector<1x32xf32>
    %c0_13 = arith.constant 0 : index
    %c0_14 = arith.constant 0 : index
    %7 = vector.load %arg9[%c0_13, %c0_14] : memref<1x32xf32, #tpu.memory_space<vmem>>, vector<1x32xf32>
    %8 = arith.truncf %0 : vector<48x34xf32> to vector<48x34xbf16>
    %cst = arith.constant dense<0.000000e+00> : vector<48x32xf32>
    %9 = tpu.matmul %8, %4, %cst {dimension_numbers = #tpu.dot_dimension_numbers<[1], [0], [0], [1], [0, 0, 1, 1], [], []>} : vector<48x34xbf16>, vector<34x32xbf16>, vector<48x32xf32> -> vector<48x32xf32>
    %10 = vector.broadcast %5 : vector<1x32xf32> to vector<48x32xf32>
    %11 = arith.addf %9, %10 : vector<48x32xf32>
    %cst_15 = arith.constant 0.000000e+00 : f32
    %12 = vector.broadcast %cst_15 : f32 to vector<48x32xf32>
    %c0_16 = arith.constant 0 : index
    %c0_17 = arith.constant 0 : index
    %c0_18 = arith.constant 0 : index
    %13 = vector.load %arg1[%c0_16, %c0_17, %c0_18] : memref<8x48x34xf32, #tpu.memory_space<vmem>>, vector<1x48x34xf32>
    %14 = vector.shape_cast %13 : vector<1x48x34xf32> to vector<48x34xf32>
    %15 = arith.subf %14, %0 : vector<48x34xf32>
    %16 = arith.truncf %15 : vector<48x34xf32> to vector<48x34xbf16>
    %cst_19 = arith.constant dense<0.000000e+00> : vector<48x34xf32>
    %17 = tpu.matmul %16, %1, %cst_19 {dimension_numbers = #tpu.dot_dimension_numbers<[1], [0], [0], [1], [0, 0, 1, 1], [], []>} : vector<48x34xbf16>, vector<34x34xbf16>, vector<48x34xf32> -> vector<48x34xf32>
    %18 = vector.broadcast %2 : vector<1x34xf32> to vector<48x34xf32>
    %19 = arith.addf %17, %18 : vector<48x34xf32>
    %20 = arith.truncf %19 : vector<48x34xf32> to vector<48x34xbf16>
    %cst_20 = arith.constant dense<0.000000e+00> : vector<48x32xf32>
    %21 = tpu.matmul %20, %3, %cst_20 {dimension_numbers = #tpu.dot_dimension_numbers<[1], [0], [0], [1], [0, 0, 1, 1], [], []>} : vector<48x34xbf16>, vector<34x32xbf16>, vector<48x32xf32> -> vector<48x32xf32>
    %22 = arith.addf %21, %11 : vector<48x32xf32>
    %cst_21 = arith.constant 0.000000e+00 : f32
    %23 = vector.broadcast %cst_21 : f32 to vector<48x32xf32>
    %24 = arith.maximumf %22, %23 : vector<48x32xf32>
    %cst_22 = arith.constant dense<0.000000e+00> : vector<48xf32>
    %25 = vector.multi_reduction <add>, %24, %cst_22 [1] : vector<48x32xf32> to vector<48xf32>
    %26 = vector.shape_cast %25 : vector<48xf32> to vector<48x1xf32>
    %cst_23 = arith.constant 3.200000e+01 : f32
    %27 = vector.broadcast %cst_23 : f32 to vector<48x1xf32>
    %28 = arith.divf %26, %27 : vector<48x1xf32>
    %29 = vector.broadcast %28 : vector<48x1xf32> to vector<48x32xf32>
    %30 = arith.subf %24, %29 : vector<48x32xf32>
    %31 = arith.mulf %30, %30 : vector<48x32xf32>
    %cst_24 = arith.constant dense<0.000000e+00> : vector<48xf32>
    %32 = vector.multi_reduction <add>, %31, %cst_24 [1] : vector<48x32xf32> to vector<48xf32>
    %33 = vector.shape_cast %32 : vector<48xf32> to vector<48x1xf32>
    %cst_25 = arith.constant 3.200000e+01 : f32
    %34 = vector.broadcast %cst_25 : f32 to vector<48x1xf32>
    %35 = arith.divf %33, %34 : vector<48x1xf32>
    %36 = vector.broadcast %28 : vector<48x1xf32> to vector<48x32xf32>
    %37 = arith.subf %24, %36 : vector<48x32xf32>
    %cst_26 = arith.constant 9.99999974E-6 : f32
    %38 = vector.broadcast %cst_26 : f32 to vector<48x1xf32>
    %39 = arith.addf %35, %38 : vector<48x1xf32>
    %40 = math.rsqrt %39 : vector<48x1xf32>
    %41 = vector.broadcast %40 : vector<48x1xf32> to vector<48x32xf32>
    %42 = arith.mulf %37, %41 : vector<48x32xf32>
    %43 = vector.broadcast %6 : vector<1x32xf32> to vector<48x32xf32>
    %44 = arith.mulf %42, %43 : vector<48x32xf32>
    %45 = arith.addf %12, %44 : vector<48x32xf32>
    %46 = vector.broadcast %7 : vector<1x32xf32> to vector<48x32xf32>
    %47 = arith.addf %45, %46 : vector<48x32xf32>
    %c1 = arith.constant 1 : index
    %c0_27 = arith.constant 0 : index
    %c0_28 = arith.constant 0 : index
    %48 = vector.load %arg1[%c1, %c0_27, %c0_28] : memref<8x48x34xf32, #tpu.memory_space<vmem>>, vector<1x48x34xf32>
    %49 = vector.shape_cast %48 : vector<1x48x34xf32> to vector<48x34xf32>
    %50 = arith.subf %49, %0 : vector<48x34xf32>
    %51 = arith.truncf %50 : vector<48x34xf32> to vector<48x34xbf16>
    %cst_29 = arith.constant dense<0.000000e+00> : vector<48x34xf32>
    %52 = tpu.matmul %51, %1, %cst_29 {dimension_numbers = #tpu.dot_dimension_numbers<[1], [0], [0], [1], [0, 0, 1, 1], [], []>} : vector<48x34xbf16>, vector<34x34xbf16>, vector<48x34xf32> -> vector<48x34xf32>
    %53 = vector.broadcast %2 : vector<1x34xf32> to vector<48x34xf32>
    %54 = arith.addf %52, %53 : vector<48x34xf32>
    %55 = arith.truncf %54 : vector<48x34xf32> to vector<48x34xbf16>
    %cst_30 = arith.constant dense<0.000000e+00> : vector<48x32xf32>
    %56 = tpu.matmul %55, %3, %cst_30 {dimension_numbers = #tpu.dot_dimension_numbers<[1], [0], [0], [1], [0, 0, 1, 1], [], []>} : vector<48x34xbf16>, vector<34x32xbf16>, vector<48x32xf32> -> vector<48x32xf32>
    %57 = arith.addf %56, %11 : vector<48x32xf32>
    %cst_31 = arith.constant 0.000000e+00 : f32
    %58 = vector.broadcast %cst_31 : f32 to vector<48x32xf32>
    %59 = arith.maximumf %57, %58 : vector<48x32xf32>
    %cst_32 = arith.constant dense<0.000000e+00> : vector<48xf32>
    %60 = vector.multi_reduction <add>, %59, %cst_32 [1] : vector<48x32xf32> to vector<48xf32>
    %61 = vector.shape_cast %60 : vector<48xf32> to vector<48x1xf32>
    %cst_33 = arith.constant 3.200000e+01 : f32
    %62 = vector.broadcast %cst_33 : f32 to vector<48x1xf32>
    %63 = arith.divf %61, %62 : vector<48x1xf32>
    %64 = vector.broadcast %63 : vector<48x1xf32> to vector<48x32xf32>
    %65 = arith.subf %59, %64 : vector<48x32xf32>
    %66 = arith.mulf %65, %65 : vector<48x32xf32>
    %cst_34 = arith.constant dense<0.000000e+00> : vector<48xf32>
    %67 = vector.multi_reduction <add>, %66, %cst_34 [1] : vector<48x32xf32> to vector<48xf32>
    %68 = vector.shape_cast %67 : vector<48xf32> to vector<48x1xf32>
    %cst_35 = arith.constant 3.200000e+01 : f32
    %69 = vector.broadcast %cst_35 : f32 to vector<48x1xf32>
    %70 = arith.divf %68, %69 : vector<48x1xf32>
    %71 = vector.broadcast %63 : vector<48x1xf32> to vector<48x32xf32>
    %72 = arith.subf %59, %71 : vector<48x32xf32>
    %cst_36 = arith.constant 9.99999974E-6 : f32
    %73 = vector.broadcast %cst_36 : f32 to vector<48x1xf32>
    %74 = arith.addf %70, %73 : vector<48x1xf32>
    %75 = math.rsqrt %74 : vector<48x1xf32>
    %76 = vector.broadcast %75 : vector<48x1xf32> to vector<48x32xf32>
    %77 = arith.mulf %72, %76 : vector<48x32xf32>
    %78 = vector.broadcast %6 : vector<1x32xf32> to vector<48x32xf32>
    %79 = arith.mulf %77, %78 : vector<48x32xf32>
    %80 = arith.addf %47, %79 : vector<48x32xf32>
    %81 = vector.broadcast %7 : vector<1x32xf32> to vector<48x32xf32>
    %82 = arith.addf %80, %81 : vector<48x32xf32>
    %c2 = arith.constant 2 : index
    %c0_37 = arith.constant 0 : index
    %c0_38 = arith.constant 0 : index
    %83 = vector.load %arg1[%c2, %c0_37, %c0_38] : memref<8x48x34xf32, #tpu.memory_space<vmem>>, vector<1x48x34xf32>
    %84 = vector.shape_cast %83 : vector<1x48x34xf32> to vector<48x34xf32>
    %85 = arith.subf %84, %0 : vector<48x34xf32>
    %86 = arith.truncf %85 : vector<48x34xf32> to vector<48x34xbf16>
    %cst_39 = arith.constant dense<0.000000e+00> : vector<48x34xf32>
    %87 = tpu.matmul %86, %1, %cst_39 {dimension_numbers = #tpu.dot_dimension_numbers<[1], [0], [0], [1], [0, 0, 1, 1], [], []>} : vector<48x34xbf16>, vector<34x34xbf16>, vector<48x34xf32> -> vector<48x34xf32>
    %88 = vector.broadcast %2 : vector<1x34xf32> to vector<48x34xf32>
    %89 = arith.addf %87, %88 : vector<48x34xf32>
    %90 = arith.truncf %89 : vector<48x34xf32> to vector<48x34xbf16>
    %cst_40 = arith.constant dense<0.000000e+00> : vector<48x32xf32>
    %91 = tpu.matmul %90, %3, %cst_40 {dimension_numbers = #tpu.dot_dimension_numbers<[1], [0], [0], [1], [0, 0, 1, 1], [], []>} : vector<48x34xbf16>, vector<34x32xbf16>, vector<48x32xf32> -> vector<48x32xf32>
    %92 = arith.addf %91, %11 : vector<48x32xf32>
    %cst_41 = arith.constant 0.000000e+00 : f32
    %93 = vector.broadcast %cst_41 : f32 to vector<48x32xf32>
    %94 = arith.maximumf %92, %93 : vector<48x32xf32>
    %cst_42 = arith.constant dense<0.000000e+00> : vector<48xf32>
    %95 = vector.multi_reduction <add>, %94, %cst_42 [1] : vector<48x32xf32> to vector<48xf32>
    %96 = vector.shape_cast %95 : vector<48xf32> to vector<48x1xf32>
    %cst_43 = arith.constant 3.200000e+01 : f32
    %97 = vector.broadcast %cst_43 : f32 to vector<48x1xf32>
    %98 = arith.divf %96, %97 : vector<48x1xf32>
    %99 = vector.broadcast %98 : vector<48x1xf32> to vector<48x32xf32>
    %100 = arith.subf %94, %99 : vector<48x32xf32>
    %101 = arith.mulf %100, %100 : vector<48x32xf32>
    %cst_44 = arith.constant dense<0.000000e+00> : vector<48xf32>
    %102 = vector.multi_reduction <add>, %101, %cst_44 [1] : vector<48x32xf32> to vector<48xf32>
    %103 = vector.shape_cast %102 : vector<48xf32> to vector<48x1xf32>
    %cst_45 = arith.constant 3.200000e+01 : f32
    %104 = vector.broadcast %cst_45 : f32 to vector<48x1xf32>
    %105 = arith.divf %103, %104 : vector<48x1xf32>
    %106 = vector.broadcast %98 : vector<48x1xf32> to vector<48x32xf32>
    %107 = arith.subf %94, %106 : vector<48x32xf32>
    %cst_46 = arith.constant 9.99999974E-6 : f32
    %108 = vector.broadcast %cst_46 : f32 to vector<48x1xf32>
    %109 = arith.addf %105, %108 : vector<48x1xf32>
    %110 = math.rsqrt %109 : vector<48x1xf32>
    %111 = vector.broadcast %110 : vector<48x1xf32> to vector<48x32xf32>
    %112 = arith.mulf %107, %111 : vector<48x32xf32>
    %113 = vector.broadcast %6 : vector<1x32xf32> to vector<48x32xf32>
    %114 = arith.mulf %112, %113 : vector<48x32xf32>
    %115 = arith.addf %82, %114 : vector<48x32xf32>
    %116 = vector.broadcast %7 : vector<1x32xf32> to vector<48x32xf32>
    %117 = arith.addf %115, %116 : vector<48x32xf32>
    %c3 = arith.constant 3 : index
    %c0_47 = arith.constant 0 : index
    %c0_48 = arith.constant 0 : index
    %118 = vector.load %arg1[%c3, %c0_47, %c0_48] : memref<8x48x34xf32, #tpu.memory_space<vmem>>, vector<1x48x34xf32>
    %119 = vector.shape_cast %118 : vector<1x48x34xf32> to vector<48x34xf32>
    %120 = arith.subf %119, %0 : vector<48x34xf32>
    %121 = arith.truncf %120 : vector<48x34xf32> to vector<48x34xbf16>
    %cst_49 = arith.constant dense<0.000000e+00> : vector<48x34xf32>
    %122 = tpu.matmul %121, %1, %cst_49 {dimension_numbers = #tpu.dot_dimension_numbers<[1], [0], [0], [1], [0, 0, 1, 1], [], []>} : vector<48x34xbf16>, vector<34x34xbf16>, vector<48x34xf32> -> vector<48x34xf32>
    %123 = vector.broadcast %2 : vector<1x34xf32> to vector<48x34xf32>
    %124 = arith.addf %122, %123 : vector<48x34xf32>
    %125 = arith.truncf %124 : vector<48x34xf32> to vector<48x34xbf16>
    %cst_50 = arith.constant dense<0.000000e+00> : vector<48x32xf32>
    %126 = tpu.matmul %125, %3, %cst_50 {dimension_numbers = #tpu.dot_dimension_numbers<[1], [0], [0], [1], [0, 0, 1, 1], [], []>} : vector<48x34xbf16>, vector<34x32xbf16>, vector<48x32xf32> -> vector<48x32xf32>
    %127 = arith.addf %126, %11 : vector<48x32xf32>
    %cst_51 = arith.constant 0.000000e+00 : f32
    %128 = vector.broadcast %cst_51 : f32 to vector<48x32xf32>
    %129 = arith.maximumf %127, %128 : vector<48x32xf32>
    %cst_52 = arith.constant dense<0.000000e+00> : vector<48xf32>
    %130 = vector.multi_reduction <add>, %129, %cst_52 [1] : vector<48x32xf32> to vector<48xf32>
    %131 = vector.shape_cast %130 : vector<48xf32> to vector<48x1xf32>
    %cst_53 = arith.constant 3.200000e+01 : f32
    %132 = vector.broadcast %cst_53 : f32 to vector<48x1xf32>
    %133 = arith.divf %131, %132 : vector<48x1xf32>
    %134 = vector.broadcast %133 : vector<48x1xf32> to vector<48x32xf32>
    %135 = arith.subf %129, %134 : vector<48x32xf32>
    %136 = arith.mulf %135, %135 : vector<48x32xf32>
    %cst_54 = arith.constant dense<0.000000e+00> : vector<48xf32>
    %137 = vector.multi_reduction <add>, %136, %cst_54 [1] : vector<48x32xf32> to vector<48xf32>
    %138 = vector.shape_cast %137 : vector<48xf32> to vector<48x1xf32>
    %cst_55 = arith.constant 3.200000e+01 : f32
    %139 = vector.broadcast %cst_55 : f32 to vector<48x1xf32>
    %140 = arith.divf %138, %139 : vector<48x1xf32>
    %141 = vector.broadcast %133 : vector<48x1xf32> to vector<48x32xf32>
    %142 = arith.subf %129, %141 : vector<48x32xf32>
    %cst_56 = arith.constant 9.99999974E-6 : f32
    %143 = vector.broadcast %cst_56 : f32 to vector<48x1xf32>
    %144 = arith.addf %140, %143 : vector<48x1xf32>
    %145 = math.rsqrt %144 : vector<48x1xf32>
    %146 = vector.broadcast %145 : vector<48x1xf32> to vector<48x32xf32>
    %147 = arith.mulf %142, %146 : vector<48x32xf32>
    %148 = vector.broadcast %6 : vector<1x32xf32> to vector<48x32xf32>
    %149 = arith.mulf %147, %148 : vector<48x32xf32>
    %150 = arith.addf %117, %149 : vector<48x32xf32>
    %151 = vector.broadcast %7 : vector<1x32xf32> to vector<48x32xf32>
    %152 = arith.addf %150, %151 : vector<48x32xf32>
    %c4 = arith.constant 4 : index
    %c0_57 = arith.constant 0 : index
    %c0_58 = arith.constant 0 : index
    %153 = vector.load %arg1[%c4, %c0_57, %c0_58] : memref<8x48x34xf32, #tpu.memory_space<vmem>>, vector<1x48x34xf32>
    %154 = vector.shape_cast %153 : vector<1x48x34xf32> to vector<48x34xf32>
    %155 = arith.subf %154, %0 : vector<48x34xf32>
    %156 = arith.truncf %155 : vector<48x34xf32> to vector<48x34xbf16>
    %cst_59 = arith.constant dense<0.000000e+00> : vector<48x34xf32>
    %157 = tpu.matmul %156, %1, %cst_59 {dimension_numbers = #tpu.dot_dimension_numbers<[1], [0], [0], [1], [0, 0, 1, 1], [], []>} : vector<48x34xbf16>, vector<34x34xbf16>, vector<48x34xf32> -> vector<48x34xf32>
    %158 = vector.broadcast %2 : vector<1x34xf32> to vector<48x34xf32>
    %159 = arith.addf %157, %158 : vector<48x34xf32>
    %160 = arith.truncf %159 : vector<48x34xf32> to vector<48x34xbf16>
    %cst_60 = arith.constant dense<0.000000e+00> : vector<48x32xf32>
    %161 = tpu.matmul %160, %3, %cst_60 {dimension_numbers = #tpu.dot_dimension_numbers<[1], [0], [0], [1], [0, 0, 1, 1], [], []>} : vector<48x34xbf16>, vector<34x32xbf16>, vector<48x32xf32> -> vector<48x32xf32>
    %162 = arith.addf %161, %11 : vector<48x32xf32>
    %cst_61 = arith.constant 0.000000e+00 : f32
    %163 = vector.broadcast %cst_61 : f32 to vector<48x32xf32>
    %164 = arith.maximumf %162, %163 : vector<48x32xf32>
    %cst_62 = arith.constant dense<0.000000e+00> : vector<48xf32>
    %165 = vector.multi_reduction <add>, %164, %cst_62 [1] : vector<48x32xf32> to vector<48xf32>
    %166 = vector.shape_cast %165 : vector<48xf32> to vector<48x1xf32>
    %cst_63 = arith.constant 3.200000e+01 : f32
    %167 = vector.broadcast %cst_63 : f32 to vector<48x1xf32>
    %168 = arith.divf %166, %167 : vector<48x1xf32>
    %169 = vector.broadcast %168 : vector<48x1xf32> to vector<48x32xf32>
    %170 = arith.subf %164, %169 : vector<48x32xf32>
    %171 = arith.mulf %170, %170 : vector<48x32xf32>
    %cst_64 = arith.constant dense<0.000000e+00> : vector<48xf32>
    %172 = vector.multi_reduction <add>, %171, %cst_64 [1] : vector<48x32xf32> to vector<48xf32>
    %173 = vector.shape_cast %172 : vector<48xf32> to vector<48x1xf32>
    %cst_65 = arith.constant 3.200000e+01 : f32
    %174 = vector.broadcast %cst_65 : f32 to vector<48x1xf32>
    %175 = arith.divf %173, %174 : vector<48x1xf32>
    %176 = vector.broadcast %168 : vector<48x1xf32> to vector<48x32xf32>
    %177 = arith.subf %164, %176 : vector<48x32xf32>
    %cst_66 = arith.constant 9.99999974E-6 : f32
    %178 = vector.broadcast %cst_66 : f32 to vector<48x1xf32>
    %179 = arith.addf %175, %178 : vector<48x1xf32>
    %180 = math.rsqrt %179 : vector<48x1xf32>
    %181 = vector.broadcast %180 : vector<48x1xf32> to vector<48x32xf32>
    %182 = arith.mulf %177, %181 : vector<48x32xf32>
    %183 = vector.broadcast %6 : vector<1x32xf32> to vector<48x32xf32>
    %184 = arith.mulf %182, %183 : vector<48x32xf32>
    %185 = arith.addf %152, %184 : vector<48x32xf32>
    %186 = vector.broadcast %7 : vector<1x32xf32> to vector<48x32xf32>
    %187 = arith.addf %185, %186 : vector<48x32xf32>
    %c5 = arith.constant 5 : index
    %c0_67 = arith.constant 0 : index
    %c0_68 = arith.constant 0 : index
    %188 = vector.load %arg1[%c5, %c0_67, %c0_68] : memref<8x48x34xf32, #tpu.memory_space<vmem>>, vector<1x48x34xf32>
    %189 = vector.shape_cast %188 : vector<1x48x34xf32> to vector<48x34xf32>
    %190 = arith.subf %189, %0 : vector<48x34xf32>
    %191 = arith.truncf %190 : vector<48x34xf32> to vector<48x34xbf16>
    %cst_69 = arith.constant dense<0.000000e+00> : vector<48x34xf32>
    %192 = tpu.matmul %191, %1, %cst_69 {dimension_numbers = #tpu.dot_dimension_numbers<[1], [0], [0], [1], [0, 0, 1, 1], [], []>} : vector<48x34xbf16>, vector<34x34xbf16>, vector<48x34xf32> -> vector<48x34xf32>
    %193 = vector.broadcast %2 : vector<1x34xf32> to vector<48x34xf32>
    %194 = arith.addf %192, %193 : vector<48x34xf32>
    %195 = arith.truncf %194 : vector<48x34xf32> to vector<48x34xbf16>
    %cst_70 = arith.constant dense<0.000000e+00> : vector<48x32xf32>
    %196 = tpu.matmul %195, %3, %cst_70 {dimension_numbers = #tpu.dot_dimension_numbers<[1], [0], [0], [1], [0, 0, 1, 1], [], []>} : vector<48x34xbf16>, vector<34x32xbf16>, vector<48x32xf32> -> vector<48x32xf32>
    %197 = arith.addf %196, %11 : vector<48x32xf32>
    %cst_71 = arith.constant 0.000000e+00 : f32
    %198 = vector.broadcast %cst_71 : f32 to vector<48x32xf32>
    %199 = arith.maximumf %197, %198 : vector<48x32xf32>
    %cst_72 = arith.constant dense<0.000000e+00> : vector<48xf32>
    %200 = vector.multi_reduction <add>, %199, %cst_72 [1] : vector<48x32xf32> to vector<48xf32>
    %201 = vector.shape_cast %200 : vector<48xf32> to vector<48x1xf32>
    %cst_73 = arith.constant 3.200000e+01 : f32
    %202 = vector.broadcast %cst_73 : f32 to vector<48x1xf32>
    %203 = arith.divf %201, %202 : vector<48x1xf32>
    %204 = vector.broadcast %203 : vector<48x1xf32> to vector<48x32xf32>
    %205 = arith.subf %199, %204 : vector<48x32xf32>
    %206 = arith.mulf %205, %205 : vector<48x32xf32>
    %cst_74 = arith.constant dense<0.000000e+00> : vector<48xf32>
    %207 = vector.multi_reduction <add>, %206, %cst_74 [1] : vector<48x32xf32> to vector<48xf32>
    %208 = vector.shape_cast %207 : vector<48xf32> to vector<48x1xf32>
    %cst_75 = arith.constant 3.200000e+01 : f32
    %209 = vector.broadcast %cst_75 : f32 to vector<48x1xf32>
    %210 = arith.divf %208, %209 : vector<48x1xf32>
    %211 = vector.broadcast %203 : vector<48x1xf32> to vector<48x32xf32>
    %212 = arith.subf %199, %211 : vector<48x32xf32>
    %cst_76 = arith.constant 9.99999974E-6 : f32
    %213 = vector.broadcast %cst_76 : f32 to vector<48x1xf32>
    %214 = arith.addf %210, %213 : vector<48x1xf32>
    %215 = math.rsqrt %214 : vector<48x1xf32>
    %216 = vector.broadcast %215 : vector<48x1xf32> to vector<48x32xf32>
    %217 = arith.mulf %212, %216 : vector<48x32xf32>
    %218 = vector.broadcast %6 : vector<1x32xf32> to vector<48x32xf32>
    %219 = arith.mulf %217, %218 : vector<48x32xf32>
    %220 = arith.addf %187, %219 : vector<48x32xf32>
    %221 = vector.broadcast %7 : vector<1x32xf32> to vector<48x32xf32>
    %222 = arith.addf %220, %221 : vector<48x32xf32>
    %c6 = arith.constant 6 : index
    %c0_77 = arith.constant 0 : index
    %c0_78 = arith.constant 0 : index
    %223 = vector.load %arg1[%c6, %c0_77, %c0_78] : memref<8x48x34xf32, #tpu.memory_space<vmem>>, vector<1x48x34xf32>
    %224 = vector.shape_cast %223 : vector<1x48x34xf32> to vector<48x34xf32>
    %225 = arith.subf %224, %0 : vector<48x34xf32>
    %226 = arith.truncf %225 : vector<48x34xf32> to vector<48x34xbf16>
    %cst_79 = arith.constant dense<0.000000e+00> : vector<48x34xf32>
    %227 = tpu.matmul %226, %1, %cst_79 {dimension_numbers = #tpu.dot_dimension_numbers<[1], [0], [0], [1], [0, 0, 1, 1], [], []>} : vector<48x34xbf16>, vector<34x34xbf16>, vector<48x34xf32> -> vector<48x34xf32>
    %228 = vector.broadcast %2 : vector<1x34xf32> to vector<48x34xf32>
    %229 = arith.addf %227, %228 : vector<48x34xf32>
    %230 = arith.truncf %229 : vector<48x34xf32> to vector<48x34xbf16>
    %cst_80 = arith.constant dense<0.000000e+00> : vector<48x32xf32>
    %231 = tpu.matmul %230, %3, %cst_80 {dimension_numbers = #tpu.dot_dimension_numbers<[1], [0], [0], [1], [0, 0, 1, 1], [], []>} : vector<48x34xbf16>, vector<34x32xbf16>, vector<48x32xf32> -> vector<48x32xf32>
    %232 = arith.addf %231, %11 : vector<48x32xf32>
    %cst_81 = arith.constant 0.000000e+00 : f32
    %233 = vector.broadcast %cst_81 : f32 to vector<48x32xf32>
    %234 = arith.maximumf %232, %233 : vector<48x32xf32>
    %cst_82 = arith.constant dense<0.000000e+00> : vector<48xf32>
    %235 = vector.multi_reduction <add>, %234, %cst_82 [1] : vector<48x32xf32> to vector<48xf32>
    %236 = vector.shape_cast %235 : vector<48xf32> to vector<48x1xf32>
    %cst_83 = arith.constant 3.200000e+01 : f32
    %237 = vector.broadcast %cst_83 : f32 to vector<48x1xf32>
    %238 = arith.divf %236, %237 : vector<48x1xf32>
    %239 = vector.broadcast %238 : vector<48x1xf32> to vector<48x32xf32>
    %240 = arith.subf %234, %239 : vector<48x32xf32>
    %241 = arith.mulf %240, %240 : vector<48x32xf32>
    %cst_84 = arith.constant dense<0.000000e+00> : vector<48xf32>
    %242 = vector.multi_reduction <add>, %241, %cst_84 [1] : vector<48x32xf32> to vector<48xf32>
    %243 = vector.shape_cast %242 : vector<48xf32> to vector<48x1xf32>
    %cst_85 = arith.constant 3.200000e+01 : f32
    %244 = vector.broadcast %cst_85 : f32 to vector<48x1xf32>
    %245 = arith.divf %243, %244 : vector<48x1xf32>
    %246 = vector.broadcast %238 : vector<48x1xf32> to vector<48x32xf32>
    %247 = arith.subf %234, %246 : vector<48x32xf32>
    %cst_86 = arith.constant 9.99999974E-6 : f32
    %248 = vector.broadcast %cst_86 : f32 to vector<48x1xf32>
    %249 = arith.addf %245, %248 : vector<48x1xf32>
    %250 = math.rsqrt %249 : vector<48x1xf32>
    %251 = vector.broadcast %250 : vector<48x1xf32> to vector<48x32xf32>
    %252 = arith.mulf %247, %251 : vector<48x32xf32>
    %253 = vector.broadcast %6 : vector<1x32xf32> to vector<48x32xf32>
    %254 = arith.mulf %252, %253 : vector<48x32xf32>
    %255 = arith.addf %222, %254 : vector<48x32xf32>
    %256 = vector.broadcast %7 : vector<1x32xf32> to vector<48x32xf32>
    %257 = arith.addf %255, %256 : vector<48x32xf32>
    %c7 = arith.constant 7 : index
    %c0_87 = arith.constant 0 : index
    %c0_88 = arith.constant 0 : index
    %258 = vector.load %arg1[%c7, %c0_87, %c0_88] : memref<8x48x34xf32, #tpu.memory_space<vmem>>, vector<1x48x34xf32>
    %259 = vector.shape_cast %258 : vector<1x48x34xf32> to vector<48x34xf32>
    %260 = arith.subf %259, %0 : vector<48x34xf32>
    %261 = arith.truncf %260 : vector<48x34xf32> to vector<48x34xbf16>
    %cst_89 = arith.constant dense<0.000000e+00> : vector<48x34xf32>
    %262 = tpu.matmul %261, %1, %cst_89 {dimension_numbers = #tpu.dot_dimension_numbers<[1], [0], [0], [1], [0, 0, 1, 1], [], []>} : vector<48x34xbf16>, vector<34x34xbf16>, vector<48x34xf32> -> vector<48x34xf32>
    %263 = vector.broadcast %2 : vector<1x34xf32> to vector<48x34xf32>
    %264 = arith.addf %262, %263 : vector<48x34xf32>
    %265 = arith.truncf %264 : vector<48x34xf32> to vector<48x34xbf16>
    %cst_90 = arith.constant dense<0.000000e+00> : vector<48x32xf32>
    %266 = tpu.matmul %265, %3, %cst_90 {dimension_numbers = #tpu.dot_dimension_numbers<[1], [0], [0], [1], [0, 0, 1, 1], [], []>} : vector<48x34xbf16>, vector<34x32xbf16>, vector<48x32xf32> -> vector<48x32xf32>
    %267 = arith.addf %266, %11 : vector<48x32xf32>
    %cst_91 = arith.constant 0.000000e+00 : f32
    %268 = vector.broadcast %cst_91 : f32 to vector<48x32xf32>
    %269 = arith.maximumf %267, %268 : vector<48x32xf32>
    %cst_92 = arith.constant dense<0.000000e+00> : vector<48xf32>
    %270 = vector.multi_reduction <add>, %269, %cst_92 [1] : vector<48x32xf32> to vector<48xf32>
    %271 = vector.shape_cast %270 : vector<48xf32> to vector<48x1xf32>
    %cst_93 = arith.constant 3.200000e+01 : f32
    %272 = vector.broadcast %cst_93 : f32 to vector<48x1xf32>
    %273 = arith.divf %271, %272 : vector<48x1xf32>
    %274 = vector.broadcast %273 : vector<48x1xf32> to vector<48x32xf32>
    %275 = arith.subf %269, %274 : vector<48x32xf32>
    %276 = arith.mulf %275, %275 : vector<48x32xf32>
    %cst_94 = arith.constant dense<0.000000e+00> : vector<48xf32>
    %277 = vector.multi_reduction <add>, %276, %cst_94 [1] : vector<48x32xf32> to vector<48xf32>
    %278 = vector.shape_cast %277 : vector<48xf32> to vector<48x1xf32>
    %cst_95 = arith.constant 3.200000e+01 : f32
    %279 = vector.broadcast %cst_95 : f32 to vector<48x1xf32>
    %280 = arith.divf %278, %279 : vector<48x1xf32>
    %281 = vector.broadcast %273 : vector<48x1xf32> to vector<48x32xf32>
    %282 = arith.subf %269, %281 : vector<48x32xf32>
    %cst_96 = arith.constant 9.99999974E-6 : f32
    %283 = vector.broadcast %cst_96 : f32 to vector<48x1xf32>
    %284 = arith.addf %280, %283 : vector<48x1xf32>
    %285 = math.rsqrt %284 : vector<48x1xf32>
    %286 = vector.broadcast %285 : vector<48x1xf32> to vector<48x32xf32>
    %287 = arith.mulf %282, %286 : vector<48x32xf32>
    %288 = vector.broadcast %6 : vector<1x32xf32> to vector<48x32xf32>
    %289 = arith.mulf %287, %288 : vector<48x32xf32>
    %290 = arith.addf %257, %289 : vector<48x32xf32>
    %291 = vector.broadcast %7 : vector<1x32xf32> to vector<48x32xf32>
    %292 = arith.addf %290, %291 : vector<48x32xf32>
    %cst_97 = arith.constant 1.250000e-01 : f32
    %293 = vector.broadcast %cst_97 : f32 to vector<48x32xf32>
    %294 = arith.mulf %292, %293 : vector<48x32xf32>
    %c0_98 = arith.constant 0 : index
    %c0_99 = arith.constant 0 : index
    %295 = vector.load %arg10[%c0_98, %c0_99] : memref<48x32xf32, #tpu.memory_space<vmem>>, vector<48x32xf32>
    tpu.vector_store %arg10[%c0_98, %c0_99], %294 {strides = array<i32>} : memref<48x32xf32, #tpu.memory_space<vmem>>, vector<48x32xf32>,
    return
  }
  func.func @transform_0(%arg0: i32) -> (i32, i32, i32) {
    %c0_i32 = arith.constant 0 : i32
    %c0_i32_0 = arith.constant 0 : i32
    %c0_i32_1 = arith.constant 0 : i32
    return %c0_i32, %arg0, %c0_i32_0 : i32, i32, i32
  }
  func.func @transform_1(%arg0: i32) -> (i32, i32) {
    %c0_i32 = arith.constant 0 : i32
    %c0_i32_0 = arith.constant 0 : i32
    return %arg0, %c0_i32 : i32, i32
  }
  func.func @transform_2(%arg0: i32) -> (i32, i32) {
    %c0_i32 = arith.constant 0 : i32
    %c0_i32_0 = arith.constant 0 : i32
    %c0_i32_1 = arith.constant 0 : i32
    return %c0_i32, %c0_i32_0 : i32, i32
  }
  func.func @transform_3(%arg0: i32) -> (i32, i32) {
    %c0_i32 = arith.constant 0 : i32
    %c0_i32_0 = arith.constant 0 : i32
    %c0_i32_1 = arith.constant 0 : i32
    return %c0_i32, %c0_i32_0 : i32, i32
  }
  func.func @transform_4(%arg0: i32) -> (i32, i32) {
    %c0_i32 = arith.constant 0 : i32
    %c0_i32_0 = arith.constant 0 : i32
    %c0_i32_1 = arith.constant 0 : i32
    return %c0_i32, %c0_i32_0 : i32, i32
  }
  func.func @transform_5(%arg0: i32) -> (i32, i32) {
    %c0_i32 = arith.constant 0 : i32
    %c0_i32_0 = arith.constant 0 : i32
    %c0_i32_1 = arith.constant 0 : i32
    return %c0_i32, %c0_i32_0 : i32, i32
  }
  func.func @transform_6(%arg0: i32) -> (i32, i32) {
    %c0_i32 = arith.constant 0 : i32
    %c0_i32_0 = arith.constant 0 : i32
    %c0_i32_1 = arith.constant 0 : i32
    return %c0_i32, %c0_i32_0 : i32, i32
  }
  func.func @transform_7(%arg0: i32) -> (i32, i32) {
    %c0_i32 = arith.constant 0 : i32
    %c0_i32_0 = arith.constant 0 : i32
    %c0_i32_1 = arith.constant 0 : i32
    return %c0_i32, %c0_i32_0 : i32, i32
  }
  func.func @transform_8(%arg0: i32) -> (i32, i32) {
    %c0_i32 = arith.constant 0 : i32
    %c0_i32_0 = arith.constant 0 : i32
    %c0_i32_1 = arith.constant 0 : i32
    return %c0_i32, %c0_i32_0 : i32, i32
  }
  func.func @transform_9(%arg0: i32) -> (i32, i32) {
    %c0_i32 = arith.constant 0 : i32
    %c0_i32_0 = arith.constant 0 : i32
    return %arg0, %c0_i32 : i32, i32
  }
}

</mosaic_0001>

<llo_original>
// kernel: custom-call.10
$region0: #{custom-call.10}
  %s0 = inlined_call_operand.vmem [shape: f32[3,32], index: 0, kind: output, shape index: {}]

// kernel: neg.1
$region0: #{neg.1}
  #allocation0 [shape = 's32[1]{0}', space=sflag, size = 0x4, scoped, tag = 'scoped memory for neg.1']
  %s0 = inlined_call_operand.vmem [shape: f32[3,16,32], index: 0, kind: input, shape index: {}]
  %s1 = inlined_call_operand.vmem [shape: f32[3,16,32], index: 1, kind: output, shape index: {}]
  %v2 = vld [vmem:[%s0] sm:$0xff]
  %3 = xla_tuple %v2
  %4 = xla_tuple %3
  %v5 = vxor.u32 %v2, 2147483648
  %6 = xla_tuple %v5
  %7 = vst [vmem:[%s1] sm:$0xff] %v5
  %s8 = scalar_lea.vmem %s0, 16
  %v9 = vld [vmem:[%s8] sm:$0xff]
  %10 = xla_tuple %v9
  %11 = xla_tuple %10
  %v12 = vxor.u32 %v9, 2147483648
  %13 = xla_tuple %v12
  %s14 = scalar_lea.vmem %s1, 16
  %15 = vst [vmem:[%s14] sm:$0xff] %v12
  %s16 = scalar_lea.vmem %s0, 32
  %v17 = vld [vmem:[%s16] sm:$0xff]
  %18 = xla_tuple %v17
  %19 = xla_tuple %18
  %v20 = vxor.u32 %v17, 2147483648
  %21 = xla_tuple %v20
  %s22 = scalar_lea.vmem %s1, 32
  %23 = vst [vmem:[%s22] sm:$0xff] %v20
  %s24 = scalar_lea.vmem %s0, 8
  %v25 = vld [vmem:[%s24] sm:$0xff]
  %26 = xla_tuple %v25
  %27 = xla_tuple %26
  %v28 = vxor.u32 %v25, 2147483648
  %29 = xla_tuple %v28
  %s30 = scalar_lea.vmem %s1, 8
  %31 = vst [vmem:[%s30] sm:$0xff] %v28
  %s32 = scalar_lea.vmem %s0, 24
  %v33 = vld [vmem:[%s32] sm:$0xff]
  %34 = xla_tuple %v33
  %35 = xla_tuple %34
  %v36 = vxor.u32 %v33, 2147483648
  %37 = xla_tuple %v36
  %s38 = scalar_lea.vmem %s1, 24
  %39 = vst [vmem:[%s38] sm:$0xff] %v36
  %s40 = scalar_lea.vmem %s0, 40
  %v41 = vld [vmem:[%s40] sm:$0xff]
  %42 = xla_tuple %v41
  %43 = xla_tuple %42
  %v44 = vxor.u32 %v41, 2147483648
  %45 = xla_tuple %v44
  %s46 = scalar_lea.vmem %s1, 40
  %47 = vst [vmem:[%s46] sm:$0xff] %v44

// kernel: _stage_step.1
$region0: #{_stage_step.1}
  #allocation0 [shape = 'u32[]', space=smem, size = 0x4, offset = 0x4, fixed_abs, tag = 'smem constant byte address 0x4 - core index']
  #allocation1 [shape = 'u32[72,128]{1,0:T(1,128)}', space=vmem, size = 0x9000, scoped, tag = 'internal scratch']
  %s0 = inlined_call_operand.vmem [shape: f32[8,48,34], index: 0, kind: input, shape index: {}]
  %s1 = inlined_call_operand.vmem [shape: f32[48,34], index: 1, kind: input, shape index: {}]
  %s2 = inlined_call_operand.vmem [shape: bf16[34,34], index: 2, kind: input, shape index: {}]
  %s3 = inlined_call_operand.vmem [shape: f32[1,34], index: 3, kind: input, shape index: {}]
  %s4 = inlined_call_operand.vmem [shape: bf16[34,32], index: 4, kind: input, shape index: {}]
  %s5 = inlined_call_operand.vmem [shape: bf16[34,32], index: 5, kind: input, shape index: {}]
  %s6 = inlined_call_operand.vmem [shape: f32[1,32], index: 6, kind: input, shape index: {}]
  %s7 = inlined_call_operand.vmem [shape: f32[1,32], index: 7, kind: input, shape index: {}]
  %s8 = inlined_call_operand.vmem [shape: f32[1,32], index: 8, kind: input, shape index: {}]
  %s9 = inlined_call_operand.hbm [shape: f32[48,32], index: 9, kind: output, shape index: {}]
  %s10 = sld [smem:[#allocation0]]
  $region46: #{_stage_step.1} parent=0
    _
  %s12 = ssub.s32 1, %s10
  %s13 = scalar_select 0, %s12, %s10
  $region1: #{_stage_step.1} parent=0
    #allocation2 [shape = 'u8[24576]{0}', space=vmem, size = 0x6000, scoped, tag = 'output window, operand 0, single buffered']
    #allocation3 [shape = 's32[1]{0}', space=sflag, size = 0x4, scoped, tag = 'scoped memory for _stage_step.1']
    %14 = vsyncpa [#allocation3], 0
    // Predicated region
    $region2: #{_stage_step.1} parent=1 // pred_check
      _
    $region3: #{_stage_step.1} parent=1 // pred_check_branch
      %16 = sbr.rel (0) target = $region5
    $region4: #{_stage_step.1} parent=1 // pred_region
      _
    $region5: #{_stage_step.1} parent=1 // pred_fallthru
      _
    // Predicated region
    $region6: #{_stage_step.1} parent=1 // pred_check
      _
    $region7: #{_stage_step.1} parent=1 // pred_check_branch
      %18 = sbr.rel (0) target = $region9
    $region8: #{_stage_step.1} parent=1 // pred_region
      _
    $region9: #{_stage_step.1} parent=1 // pred_fallthru
      _
    // Predicated region
    $region10: #{_stage_step.1} parent=1 // pred_check
      _
    $region11: #{_stage_step.1} parent=1 // pred_check_branch
      %20 = sbr.rel (0) target = $region13
    $region12: #{_stage_step.1} parent=1 // pred_region
      _
    $region13: #{_stage_step.1} parent=1 // pred_fallthru
      _
    // Predicated region
    $region14: #{_stage_step.1} parent=1 // pred_check
      _
    $region15: #{_stage_step.1} parent=1 // pred_check_branch
      %22 = sbr.rel (0) target = $region17
    $region16: #{_stage_step.1} parent=1 // pred_region
      _
    $region17: #{_stage_step.1} parent=1 // pred_fallthru
      _
    // Predicated region
    $region18: #{_stage_step.1} parent=1 // pred_check
      _
    $region19: #{_stage_step.1} parent=1 // pred_check_branch
      %24 = sbr.rel (0) target = $region21
    $region20: #{_stage_step.1} parent=1 // pred_region
      _
    $region21: #{_stage_step.1} parent=1 // pred_fallthru
      _
    // Predicated region
    $region22: #{_stage_step.1} parent=1 // pred_check
      _
    $region23: #{_stage_step.1} parent=1 // pred_check_branch
      %26 = sbr.rel (0) target = $region25
    $region24: #{_stage_step.1} parent=1 // pred_region
      _
    $region25: #{_stage_step.1} parent=1 // pred_fallthru
      _
    // Predicated region
    $region26: #{_stage_step.1} parent=1 // pred_check
      _
    $region27: #{_stage_step.1} parent=1 // pred_check_branch
      %28 = sbr.rel (0) target = $region29
    $region28: #{_stage_step.1} parent=1 // pred_region
      _
    $region29: #{_stage_step.1} parent=1 // pred_fallthru
      _
    // Predicated region
    $region30: #{_stage_step.1} parent=1 // pred_check
      _
    $region31: #{_stage_step.1} parent=1 // pred_check_branch
      %30 = sbr.rel (0) target = $region33
    $region32: #{_stage_step.1} parent=1 // pred_region
      _
    $region33: #{_stage_step.1} parent=1 // pred_fallthru
      _
    // Predicated region
    $region34: #{_stage_step.1} parent=1 // pred_check
      _
    $region35: #{_stage_step.1} parent=1 // pred_check_branch
      %32 = sbr.rel (0) target = $region37
    $region36: #{_stage_step.1} parent=1 // pred_region
      _
    $region37: #{_stage_step.1} parent=1 // pred_fallthru
      _
    %v34 = vld [vmem:[%s1] sm:$0xff]
    %v35 = vld [vmem:[%s1 + $0x8] sm:$0xff]
    %v36 = vld [vmem:[%s1 + $0x10] sm:$0xff]
    %v37 = vld [vmem:[%s1 + $0x18] sm:$0xff]
    %v38 = vld [vmem:[%s1 + $0x20] sm:$0xff]
    %v39 = vld [vmem:[%s1 + $0x28] sm:$0xff]
    %v40 = vld [vmem:[%s2] sm:$0xf]
    %v41 = vld [vmem:[%s2 + $0x4] sm:$0xf]
    %v42 = vld [vmem:[%s2 + $0x8] sm:$0xf]
    %v43 = vld [vmem:[%s2 + $0xc] sm:$0xf]
    %v44 = vld [vmem:[%s2 + $0x10] sm:$0x1]
    %v45 = vld [vmem:[%s3] sm:$0x1]
    %v46 = vld [vmem:[%s4] sm:$0xf]
    %v47 = vld [vmem:[%s4 + $0x4] sm:$0xf]
    %v48 = vld [vmem:[%s4 + $0x8] sm:$0xf]
    %v49 = vld [vmem:[%s4 + $0xc] sm:$0xf]
    %v50 = vld [vmem:[%s4 + $0x10] sm:$0x1]
    %v51 = vld [vmem:[%s5] sm:$0xf]
    %v52 = vld [vmem:[%s5 + $0x4] sm:$0xf]
    %v53 = vld [vmem:[%s5 + $0x8] sm:$0xf]
    %v54 = vld [vmem:[%s5 + $0xc] sm:$0xf]
    %v55 = vld [vmem:[%s5 + $0x10] sm:$0x1]
    %v56 = vld [vmem:[%s6] sm:$0x1]
    %v57 = vld [vmem:[%s7] sm:$0x1]
    %v58 = vld [vmem:[%s8] sm:$0x1]
    %v59 = vpack.c.bf16 %v35, %v34
    %v60 = vpack.c.bf16 %v37, %v36
    %v61 = vpack.c.bf16 %v39, %v38
    %v63 = vperm.slane %v56, 0
    %v70 = vunpack.c.l.b16 %v51
    %v71 = vunpack.c.l.b16 %v52
    %v72 = vunpack.c.l.b16 %v53
    %v73 = vunpack.c.l.b16 %v54
    %v74 = vunpack.c.l.b16 %v55
    %v75 = vpack.c.b16 %v71, %v70
    %v76 = vpack.c.b16 %v73, %v72
    %v77 = vpack.c.b16 %v74, %v74
    %vm80 = vcmask 277504
    %v82 = vsel %vm80, %v59, 0
    %v85 = vsel %vm80, %v60, 0
    %v88 = vsel %vm80, %v61, 0
    %vm90 = vcmask 1040384
    %v92 = vsel %vm90, %v77, 0
    %94 = vmatpush.bf16.msra.mxu0 0
    %95 = vmatpush.bf16.msra.mxu0 0
    %96 = vmatpush.bf16.msra.mxu0 0
    %97 = vmatpush.bf16.msra.mxu0 0
    %98 = vmatpush.bf16.msra.mxu0 0
    %99 = vmatpush.bf16.msra.mxu0 %v92
    %100 = vmatpush.bf16.msra.mxu0 %v76
    %101 = vmatpush.bf16.msra.mxu0 %v75
    %102 = vmatmul.bf16.gmra.mxu0 %v82
    %v103 = vpop.f32.mrf.mxu0
    %v104 = vadd.f32 %v63, %v103
    %v105 = vpop.f32.mrf.mxu0
    %v106 = vadd.f32 %v63, %v105
    %107 = vmatmul.bf16.gmra.mxu0 %v85
    %v108 = vpop.f32.mrf.mxu0
    %v109 = vadd.f32 %v63, %v108
    %v110 = vpop.f32.mrf.mxu0
    %v111 = vadd.f32 %v63, %v110
    %112 = vmatmul.bf16.gmra.mxu0 %v88
    %v113 = vpop.f32.mrf.mxu0
    %v114 = vadd.f32 %v63, %v113
    %v115 = vpop.f32.mrf.mxu0
    %v116 = vadd.f32 %v63, %v115
    %117 = vdwg.mxu0
    %v118 = vld [vmem:[%s0] sm:$0xff]
    %v119 = vld [vmem:[%s0 + $0x8] sm:$0xff]
    %v120 = vld [vmem:[%s0 + $0x10] sm:$0xff]
    %v121 = vld [vmem:[%s0 + $0x18] sm:$0xff]
    %v122 = vld [vmem:[%s0 + $0x20] sm:$0xff]
    %v123 = vld [vmem:[%s0 + $0x28] sm:$0xff]
    %v124 = vsub.f32 %v118, %v34
    %v125 = vsub.f32 %v119, %v35
    %v126 = vsub.f32 %v120, %v36
    %v127 = vsub.f32 %v121, %v37
    %v128 = vsub.f32 %v122, %v38
    %v129 = vsub.f32 %v123, %v39
    %v130 = vpack.c.bf16 %v125, %v124
    %v131 = vpack.c.bf16 %v127, %v126
    %v132 = vpack.c.bf16 %v129, %v128
    %v134 = vperm.slane %v45, 0
    %v141 = vunpack.c.l.b16 %v40
    %v142 = vunpack.c.l.b16 %v41
    %v143 = vunpack.c.l.b16 %v42
    %v144 = vunpack.c.l.b16 %v43
    %v145 = vunpack.c.l.b16 %v44
    %v146 = vpack.c.b16 %v142, %v141
    %v147 = vpack.c.b16 %v144, %v143
    %v148 = vpack.c.b16 %v145, %v145
    %v152 = vsel %vm80, %v130, 0
    %v155 = vsel %vm80, %v131, 0
    %v158 = vsel %vm80, %v132, 0
    %v161 = vsel %vm90, %v148, 0
    %163 = vmatpush.bf16.msra.mxu0 0
    %164 = vmatpush.bf16.msra.mxu0 0
    %165 = vmatpush.bf16.msra.mxu0 0
    %166 = vmatpush.bf16.msra.mxu0 0
    %167 = vmatpush.bf16.msra.mxu0 0
    %168 = vmatpush.bf16.msra.mxu0 %v161
    %169 = vmatpush.bf16.msra.mxu0 %v147
    %170 = vmatpush.bf16.msra.mxu0 %v146
    %171 = vmatmul.bf16.gmra.mxu0 %v152
    %v172 = vpop.f32.mrf.mxu0
    %v173 = vadd.f32 %v134, %v172
    %v174 = vpop.f32.mrf.mxu0
    %v175 = vadd.f32 %v134, %v174
    %176 = vmatmul.bf16.gmra.mxu0 %v155
    %v177 = vpop.f32.mrf.mxu0
    %v178 = vadd.f32 %v134, %v177
    %v179 = vpop.f32.mrf.mxu0
    %v180 = vadd.f32 %v134, %v179
    %181 = vmatmul.bf16.gmra.mxu0 %v158
    %v182 = vpop.f32.mrf.mxu0
    %v183 = vadd.f32 %v134, %v182
    %v184 = vpop.f32.mrf.mxu0
    %v185 = vadd.f32 %v134, %v184
    %186 = vdwg.mxu0
    %v187 = vpack.c.bf16 %v175, %v173
    %v188 = vpack.c.bf16 %v180, %v178
    %v189 = vpack.c.bf16 %v185, %v183
    %v195 = vunpack.c.l.b16 %v46
    %v196 = vunpack.c.l.b16 %v47
    %v197 = vunpack.c.l.b16 %v48
    %v198 = vunpack.c.l.b16 %v49
    %v199 = vunpack.c.l.b16 %v50
    %v200 = vpack.c.b16 %v196, %v195
    %v201 = vpack.c.b16 %v198, %v197
    %v202 = vpack.c.b16 %v199, %v199
    %v206 = vsel %vm80, %v187, 0
    %v209 = vsel %vm80, %v188, 0
    %v212 = vsel %vm80, %v189, 0
    %v215 = vsel %vm90, %v202, 0
    %217 = vmatpush.bf16.msra.mxu0 0
    %218 = vmatpush.bf16.msra.mxu0 0
    %219 = vmatpush.bf16.msra.mxu0 0
    %220 = vmatpush.bf16.msra.mxu0 0
    %221 = vmatpush.bf16.msra.mxu0 0
    %222 = vmatpush.bf16.msra.mxu0 %v215
    %223 = vmatpush.bf16.msra.mxu0 %v201
    %224 = vmatpush.bf16.msra.mxu0 %v200
    %225 = vmatmul.bf16.gmra.mxu0 %v206
    %v226 = vpop.f32.mrf.mxu0
    %v227 = vadd.f32 %v104, %v226
    %v228 = vpop.f32.mrf.mxu0
    %v229 = vadd.f32 %v106, %v228
    %230 = vmatmul.bf16.gmra.mxu0 %v209
    %v231 = vpop.f32.mrf.mxu0
    %v232 = vadd.f32 %v109, %v231
    %v233 = vpop.f32.mrf.mxu0
    %v234 = vadd.f32 %v111, %v233
    %235 = vmatmul.bf16.gmra.mxu0 %v212
    %v236 = vpop.f32.mrf.mxu0
    %v237 = vadd.f32 %v114, %v236
    %v238 = vpop.f32.mrf.mxu0
    %v239 = vadd.f32 %v116, %v238
    %240 = vdwg.mxu0
    %v241 = vmax.f32 %v227, 0.0
    %v242 = vmax.f32 %v229, 0.0
    %v243 = vmax.f32 %v232, 0.0
    %v244 = vmax.f32 %v234, 0.0
    %v245 = vmax.f32 %v237, 0.0
    %v246 = vmax.f32 %v239, 0.0
    %vm247 = vcmask 261120
    %v248 = vsel %vm247, %v241, 0.0
    %249 = vadd.xlane.f32.xlu0 %v248
    %v250 = vpop.xlane.xlu0 %249
    %v251 = vsel %vm247, %v242, 0.0
    %252 = vadd.xlane.f32.xlu0 %v251
    %v253 = vpop.xlane.xlu0 %252
    %v254 = vsel %vm247, %v243, 0.0
    %255 = vadd.xlane.f32.xlu0 %v254
    %v256 = vpop.xlane.xlu0 %255
    %v257 = vsel %vm247, %v244, 0.0
    %258 = vadd.xlane.f32.xlu0 %v257
    %v259 = vpop.xlane.xlu0 %258
    %v260 = vsel %vm247, %v245, 0.0
    %261 = vadd.xlane.f32.xlu0 %v260
    %v262 = vpop.xlane.xlu0 %261
    %v263 = vsel %vm247, %v246, 0.0
    %264 = vadd.xlane.f32.xlu0 %v263
    %v265 = vpop.xlane.xlu0 %264
    %v266 = vrcp.pop 32.0
    %v267 = vmul.f32 32.0, %v266
    %v268 = vsub.f32 1.0, %v267
    %v269 = vmul.f32 %v266, %v268
    %v270 = vadd.f32 %v266, %v269
    %vm271 = vweird.f32 %v266
    %v272 = vsel %vm271, %v266, %v270
    %v273 = vmul.f32 %v250, %v272
    %v274 = vmul.f32 %v253, %v272
    %v275 = vmul.f32 %v256, %v272
    %v276 = vmul.f32 %v259, %v272
    %v277 = vmul.f32 %v262, %v272
    %v278 = vmul.f32 %v265, %v272
    %v279 = vsub.f32 %v241, %v273
    %v280 = vsub.f32 %v242, %v274
    %v281 = vsub.f32 %v243, %v275
    %v282 = vsub.f32 %v244, %v276
    %v283 = vsub.f32 %v245, %v277
    %v284 = vsub.f32 %v246, %v278
    %v285 = vmul.f32 %v279, %v279
    %v286 = vmul.f32 %v280, %v280
    %v287 = vmul.f32 %v281, %v281
    %v288 = vmul.f32 %v282, %v282
    %v289 = vmul.f32 %v283, %v283
    %v290 = vmul.f32 %v284, %v284
    %v291 = vsel %vm247, %v285, 0.0
    %292 = vadd.xlane.f32.xlu0 %v291
    %v293 = vpop.xlane.xlu0 %292
    %v294 = vsel %vm247, %v286, 0.0
    %295 = vadd.xlane.f32.xlu0 %v294
    %v296 = vpop.xlane.xlu0 %295
    %v297 = vsel %vm247, %v287, 0.0
    %298 = vadd.xlane.f32.xlu0 %v297
    %v299 = vpop.xlane.xlu0 %298
    %v300 = vsel %vm247, %v288, 0.0
    %301 = vadd.xlane.f32.xlu0 %v300
    %v302 = vpop.xlane.xlu0 %301
    %v303 = vsel %vm247, %v289, 0.0
    %304 = vadd.xlane.f32.xlu0 %v303
    %v305 = vpop.xlane.xlu0 %304
    %v306 = vsel %vm247, %v290, 0.0
    %307 = vadd.xlane.f32.xlu0 %v306
    %v308 = vpop.xlane.xlu0 %307
    %v309 = vmul.f32 %v293, %v272
    %v310 = vmul.f32 %v296, %v272
    %v311 = vmul.f32 %v299, %v272
    %v312 = vmul.f32 %v302, %v272
    %v313 = vmul.f32 %v305, %v272
    %v314 = vmul.f32 %v308, %v272
    %v315 = vadd.f32 %v309, 1e-05
    %v316 = vadd.f32 %v310, 1e-05
    %v317 = vadd.f32 %v311, 1e-05
    %v318 = vadd.f32 %v312, 1e-05
    %v319 = vadd.f32 %v313, 1e-05
    %v320 = vadd.f32 %v314, 1e-05
    %v321 = vrsqrt.pop %v315
    %v322 = vmul.f32 %v321, %v315
    %v323 = vmul.f32 %v322, %v321
    %v324 = vmul.f32 0.5, %v323
    %v325 = vsub.f32 1.5, %v324
    %v326 = vmul.f32 %v321, %v325
    %vm327 = vweird.f32 %v315
    %vm328 = vweird.f32 %v321
    %vm329 = vmor %vm327, %vm328
    %v330 = vsel %vm329, %v321, %v326
    %v331 = vrsqrt.pop %v316
    %v332 = vmul.f32 %v331, %v316
    %v333 = vmul.f32 %v332, %v331
    %v334 = vmul.f32 0.5, %v333
    %v335 = vsub.f32 1.5, %v334
    %v336 = vmul.f32 %v331, %v335
    %vm337 = vweird.f32 %v316
    %vm338 = vweird.f32 %v331
    %vm339 = vmor %vm337, %vm338
    %v340 = vsel %vm339, %v331, %v336
    %v341 = vrsqrt.pop %v317
    %v342 = vmul.f32 %v341, %v317
    %v343 = vmul.f32 %v342, %v341
    %v344 = vmul.f32 0.5, %v343
    %v345 = vsub.f32 1.5, %v344
    %v346 = vmul.f32 %v341, %v345
    %vm347 = vweird.f32 %v317
    %vm348 = vweird.f32 %v341
    %vm349 = vmor %vm347, %vm348
    %v350 = vsel %vm349, %v341, %v346
    %v351 = vrsqrt.pop %v318
    %v352 = vmul.f32 %v351, %v318
    %v353 = vmul.f32 %v352, %v351
    %v354 = vmul.f32 0.5, %v353
    %v355 = vsub.f32 1.5, %v354
    %v356 = vmul.f32 %v351, %v355
    %vm357 = vweird.f32 %v318
    %vm358 = vweird.f32 %v351
    %vm359 = vmor %vm357, %vm358
    %v360 = vsel %vm359, %v351, %v356
    %v361 = vrsqrt.pop %v319
    %v362 = vmul.f32 %v361, %v319
    %v363 = vmul.f32 %v362, %v361
    %v364 = vmul.f32 0.5, %v363
    %v365 = vsub.f32 1.5, %v364
    %v366 = vmul.f32 %v361, %v365
    %vm367 = vweird.f32 %v319
    %vm368 = vweird.f32 %v361
    %vm369 = vmor %vm367, %vm368
    %v370 = vsel %vm369, %v361, %v366
    %v371 = vrsqrt.pop %v320
    %v372 = vmul.f32 %v371, %v320
    %v373 = vmul.f32 %v372, %v371
    %v374 = vmul.f32 0.5, %v373
    %v375 = vsub.f32 1.5, %v374
    %v376 = vmul.f32 %v371, %v375
    %vm377 = vweird.f32 %v320
    %vm378 = vweird.f32 %v371
    %vm379 = vmor %vm377, %vm378
    %v380 = vsel %vm379, %v371, %v376
    %v381 = vmul.f32 %v279, %v330
    %v382 = vmul.f32 %v280, %v340
    %v383 = vmul.f32 %v281, %v350
    %v384 = vmul.f32 %v282, %v360
    %v385 = vmul.f32 %v283, %v370
    %v386 = vmul.f32 %v284, %v380
    %v388 = vperm.slane %v57, 0
    %v390 = vmul.f32 %v381, %v388
    %v391 = vmul.f32 %v382, %v388
    %v392 = vmul.f32 %v383, %v388
    %v393 = vmul.f32 %v384, %v388
    %v394 = vmul.f32 %v385, %v388
    %v395 = vmul.f32 %v386, %v388
    %v396 = vadd.f32 %v390, 0.0
    %v397 = vadd.f32 %v391, 0.0
    %v398 = vadd.f32 %v392, 0.0
    %v399 = vadd.f32 %v393, 0.0
    %v400 = vadd.f32 %v394, 0.0
    %v401 = vadd.f32 %v395, 0.0
    %v403 = vperm.slane %v58, 0
    %v405 = vadd.f32 %v396, %v403
    %v406 = vadd.f32 %v397, %v403
    %v407 = vadd.f32 %v398, %v403
    %v408 = vadd.f32 %v399, %v403
    %v409 = vadd.f32 %v400, %v403
    %v410 = vadd.f32 %v401, %v403
    %s411 = scalar_lea.vmem %s0, 48
    %v412 = vld [vmem:[%s411] sm:$0xff]
    %v413 = vld [vmem:[%s411 + $0x8] sm:$0xff]
    %v414 = vld [vmem:[%s411 + $0x10] sm:$0xff]
    %v415 = vld [vmem:[%s411 + $0x18] sm:$0xff]
    %v416 = vld [vmem:[%s411 + $0x20] sm:$0xff]
    %v417 = vld [vmem:[%s411 + $0x28] sm:$0xff]
    %v418 = vsub.f32 %v412, %v34
    %v419 = vsub.f32 %v413, %v35
    %v420 = vsub.f32 %v414, %v36
    %v421 = vsub.f32 %v415, %v37
    %v422 = vsub.f32 %v416, %v38
    %v423 = vsub.f32 %v417, %v39
    %v424 = vpack.c.bf16 %v419, %v418
    %v425 = vpack.c.bf16 %v421, %v420
    %v426 = vpack.c.bf16 %v423, %v422
    %v428 = vsel %vm80, %v424, 0
    %v431 = vsel %vm80, %v425, 0
    %v434 = vsel %vm80, %v426, 0
    %436 = vmatpush.bf16.msra.mxu0 0
    %437 = vmatpush.bf16.msra.mxu0 0
    %438 = vmatpush.bf16.msra.mxu0 0
    %439 = vmatpush.bf16.msra.mxu0 0
    %440 = vmatpush.bf16.msra.mxu0 0
    %441 = vmatpush.bf16.msra.mxu0 %v161
    %442 = vmatpush.bf16.msra.mxu0 %v147
    %443 = vmatpush.bf16.msra.mxu0 %v146
    %444 = vmatmul.bf16.gmra.mxu0 %v428
    %v445 = vpop.f32.mrf.mxu0
    %v446 = vadd.f32 %v134, %v445
    %v447 = vpop.f32.mrf.mxu0
    %v448 = vadd.f32 %v134, %v447
    %449 = vmatmul.bf16.gmra.mxu0 %v431
    %v450 = vpop.f32.mrf.mxu0
    %v451 = vadd.f32 %v134, %v450
    %v452 = vpop.f32.mrf.mxu0
    %v453 = vadd.f32 %v134, %v452
    %454 = vmatmul.bf16.gmra.mxu0 %v434
    %v455 = vpop.f32.mrf.mxu0
    %v456 = vadd.f32 %v134, %v455
    %v457 = vpop.f32.mrf.mxu0
    %v458 = vadd.f32 %v134, %v457
    %459 = vdwg.mxu0
    %v460 = vpack.c.bf16 %v448, %v446
    %v461 = vpack.c.bf16 %v453, %v451
    %v462 = vpack.c.bf16 %v458, %v456
    %v464 = vsel %vm80, %v460, 0
    %v467 = vsel %vm80, %v461, 0
    %v470 = vsel %vm80, %v462, 0
    %472 = vmatpush.bf16.msra.mxu0 0
    %473 = vmatpush.bf16.msra.mxu0 0
    %474 = vmatpush.bf16.msra.mxu0 0
    %475 = vmatpush.bf16.msra.mxu0 0
    %476 = vmatpush.bf16.msra.mxu0 0
    %477 = vmatpush.bf16.msra.mxu0 %v215
    %478 = vmatpush.bf16.msra.mxu0 %v201
    %479 = vmatpush.bf16.msra.mxu0 %v200
    %480 = vmatmul.bf16.gmra.mxu0 %v464
    %v481 = vpop.f32.mrf.mxu0
    %v482 = vadd.f32 %v104, %v481
    %v483 = vpop.f32.mrf.mxu0
    %v484 = vadd.f32 %v106, %v483
    %485 = vmatmul.bf16.gmra.mxu0 %v467
    %v486 = vpop.f32.mrf.mxu0
    %v487 = vadd.f32 %v109, %v486
    %v488 = vpop.f32.mrf.mxu0
    %v489 = vadd.f32 %v111, %v488
    %490 = vmatmul.bf16.gmra.mxu0 %v470
    %v491 = vpop.f32.mrf.mxu0
    %v492 = vadd.f32 %v114, %v491
    %v493 = vpop.f32.mrf.mxu0
    %v494 = vadd.f32 %v116, %v493
    %495 = vdwg.mxu0
    %v496 = vmax.f32 %v482, 0.0
    %v497 = vmax.f32 %v484, 0.0
    %v498 = vmax.f32 %v487, 0.0
    %v499 = vmax.f32 %v489, 0.0
    %v500 = vmax.f32 %v492, 0.0
    %v501 = vmax.f32 %v494, 0.0
    %v502 = vsel %vm247, %v496, 0.0
    %503 = vadd.xlane.f32.xlu0 %v502
    %v504 = vpop.xlane.xlu0 %503
    %v505 = vsel %vm247, %v497, 0.0
    %506 = vadd.xlane.f32.xlu0 %v505
    %v507 = vpop.xlane.xlu0 %506
    %v508 = vsel %vm247, %v498, 0.0
    %509 = vadd.xlane.f32.xlu0 %v508
    %v510 = vpop.xlane.xlu0 %509
    %v511 = vsel %vm247, %v499, 0.0
    %512 = vadd.xlane.f32.xlu0 %v511
    %v513 = vpop.xlane.xlu0 %512
    %v514 = vsel %vm247, %v500, 0.0
    %515 = vadd.xlane.f32.xlu0 %v514
    %v516 = vpop.xlane.xlu0 %515
    %v517 = vsel %vm247, %v501, 0.0
    %518 = vadd.xlane.f32.xlu0 %v517
    %v519 = vpop.xlane.xlu0 %518
    %v520 = vmul.f32 %v504, %v272
    %v521 = vmul.f32 %v507, %v272
    %v522 = vmul.f32 %v510, %v272
    %v523 = vmul.f32 %v513, %v272
    %v524 = vmul.f32 %v516, %v272
    %v525 = vmul.f32 %v519, %v272
    %v526 = vsub.f32 %v496, %v520
    %v527 = vsub.f32 %v497, %v521
    %v528 = vsub.f32 %v498, %v522
    %v529 = vsub.f32 %v499, %v523
    %v530 = vsub.f32 %v500, %v524
    %v531 = vsub.f32 %v501, %v525
    %v532 = vmul.f32 %v526, %v526
    %v533 = vmul.f32 %v527, %v527
    %v534 = vmul.f32 %v528, %v528
    %v535 = vmul.f32 %v529, %v529
    %v536 = vmul.f32 %v530, %v530
    %v537 = vmul.f32 %v531, %v531
    %v538 = vsel %vm247, %v532, 0.0
    %539 = vadd.xlane.f32.xlu0 %v538
    %v540 = vpop.xlane.xlu0 %539
    %v541 = vsel %vm247, %v533, 0.0
    %542 = vadd.xlane.f32.xlu0 %v541
    %v543 = vpop.xlane.xlu0 %542
    %v544 = vsel %vm247, %v534, 0.0
    %545 = vadd.xlane.f32.xlu0 %v544
    %v546 = vpop.xlane.xlu0 %545
    %v547 = vsel %vm247, %v535, 0.0
    %548 = vadd.xlane.f32.xlu0 %v547
    %v549 = vpop.xlane.xlu0 %548
    %v550 = vsel %vm247, %v536, 0.0
    %551 = vadd.xlane.f32.xlu0 %v550
    %v552 = vpop.xlane.xlu0 %551
    %v553 = vsel %vm247, %v537, 0.0
    %554 = vadd.xlane.f32.xlu0 %v553
    %v555 = vpop.xlane.xlu0 %554
    %v556 = vmul.f32 %v540, %v272
    %v557 = vmul.f32 %v543, %v272
    %v558 = vmul.f32 %v546, %v272
    %v559 = vmul.f32 %v549, %v272
    %v560 = vmul.f32 %v552, %v272
    %v561 = vmul.f32 %v555, %v272
    %v562 = vadd.f32 %v556, 1e-05
    %v563 = vadd.f32 %v557, 1e-05
    %v564 = vadd.f32 %v558, 1e-05
    %v565 = vadd.f32 %v559, 1e-05
    %v566 = vadd.f32 %v560, 1e-05
    %v567 = vadd.f32 %v561, 1e-05
    %v568 = vrsqrt.pop %v562
    %v569 = vmul.f32 %v568, %v562
    %v570 = vmul.f32 %v569, %v568
    %v571 = vmul.f32 0.5, %v570
    %v572 = vsub.f32 1.5, %v571
    %v573 = vmul.f32 %v568, %v572
    %vm574 = vweird.f32 %v562
    %vm575 = vweird.f32 %v568
    %vm576 = vmor %vm574, %vm575
    %v577 = vsel %vm576, %v568, %v573
    %v578 = vrsqrt.pop %v563
    %v579 = vmul.f32 %v578, %v563
    %v580 = vmul.f32 %v579, %v578
    %v581 = vmul.f32 0.5, %v580
    %v582 = vsub.f32 1.5, %v581
    %v583 = vmul.f32 %v578, %v582
    %vm584 = vweird.f32 %v563
    %vm585 = vweird.f32 %v578
    %vm586 = vmor %vm584, %vm585
    %v587 = vsel %vm586, %v578, %v583
    %v588 = vrsqrt.pop %v564
    %v589 = vmul.f32 %v588, %v564
    %v590 = vmul.f32 %v589, %v588
    %v591 = vmul.f32 0.5, %v590
    %v592 = vsub.f32 1.5, %v591
    %v593 = vmul.f32 %v588, %v592
    %vm594 = vweird.f32 %v564
    %vm595 = vweird.f32 %v588
    %vm596 = vmor %vm594, %vm595
    %v597 = vsel %vm596, %v588, %v593
    %v598 = vrsqrt.pop %v565
    %v599 = vmul.f32 %v598, %v565
    %v600 = vmul.f32 %v599, %v598
    %v601 = vmul.f32 0.5, %v600
    %v602 = vsub.f32 1.5, %v601
    %v603 = vmul.f32 %v598, %v602
    %vm604 = vweird.f32 %v565
    %vm605 = vweird.f32 %v598
    %vm606 = vmor %vm604, %vm605
    %v607 = vsel %vm606, %v598, %v603
    %v608 = vrsqrt.pop %v566
    %v609 = vmul.f32 %v608, %v566
    %v610 = vmul.f32 %v609, %v608
    %v611 = vmul.f32 0.5, %v610
    %v612 = vsub.f32 1.5, %v611
    %v613 = vmul.f32 %v608, %v612
    %vm614 = vweird.f32 %v566
    %vm615 = vweird.f32 %v608
    %vm616 = vmor %vm614, %vm615
    %v617 = vsel %vm616, %v608, %v613
    %v618 = vrsqrt.pop %v567
    %v619 = vmul.f32 %v618, %v567
    %v620 = vmul.f32 %v619, %v618
    %v621 = vmul.f32 0.5, %v620
    %v622 = vsub.f32 1.5, %v621
    %v623 = vmul.f32 %v618, %v622
    %vm624 = vweird.f32 %v567
    %vm625 = vweird.f32 %v618
    %vm626 = vmor %vm624, %vm625
    %v627 = vsel %vm626, %v618, %v623
    %v628 = vmul.f32 %v526, %v577
    %v629 = vmul.f32 %v527, %v587
    %v630 = vmul.f32 %v528, %v597
    %v631 = vmul.f32 %v529, %v607
    %v632 = vmul.f32 %v530, %v617
    %v633 = vmul.f32 %v531, %v627
    %v634 = vmul.f32 %v628, %v388
    %v635 = vmul.f32 %v629, %v388
    %v636 = vmul.f32 %v630, %v388
    %v637 = vmul.f32 %v631, %v388
    %v638 = vmul.f32 %v632, %v388
    %v639 = vmul.f32 %v633, %v388
    %v640 = vadd.f32 %v405, %v634
    %v641 = vadd.f32 %v406, %v635
    %v642 = vadd.f32 %v407, %v636
    %v643 = vadd.f32 %v408, %v637
    %v644 = vadd.f32 %v409, %v638
    %v645 = vadd.f32 %v410, %v639
    %v646 = vadd.f32 %v640, %v403
    %v647 = vadd.f32 %v641, %v403
    %v648 = vadd.f32 %v642, %v403
    %v649 = vadd.f32 %v643, %v403
    %v650 = vadd.f32 %v644, %v403
    %v651 = vadd.f32 %v645, %v403
    %s652 = scalar_lea.vmem %s0, 96
    %v653 = vld [vmem:[%s652] sm:$0xff]
    %v654 = vld [vmem:[%s652 + $0x8] sm:$0xff]
    %v655 = vld [vmem:[%s652 + $0x10] sm:$0xff]
    %v656 = vld [vmem:[%s652 + $0x18] sm:$0xff]
    %v657 = vld [vmem:[%s652 + $0x20] sm:$0xff]
    %v658 = vld [vmem:[%s652 + $0x28] sm:$0xff]
    %v659 = vsub.f32 %v653, %v34
    %v660 = vsub.f32 %v654, %v35
    %v661 = vsub.f32 %v655, %v36
    %v662 = vsub.f32 %v656, %v37
    %v663 = vsub.f32 %v657, %v38
    %v664 = vsub.f32 %v658, %v39
    %v665 = vpack.c.bf16 %v660, %v659
    %v666 = vpack.c.bf16 %v662, %v661
    %v667 = vpack.c.bf16 %v664, %v663
    %v669 = vsel %vm80, %v665, 0
    %v672 = vsel %vm80, %v666, 0
    %v675 = vsel %vm80, %v667, 0
    %677 = vmatpush.bf16.msra.mxu0 0
    %678 = vmatpush.bf16.msra.mxu0 0
    %679 = vmatpush.bf16.msra.mxu0 0
    %680 = vmatpush.bf16.msra.mxu0 0
    %681 = vmatpush.bf16.msra.mxu0 0
    %682 = vmatpush.bf16.msra.mxu0 %v161
    %683 = vmatpush.bf16.msra.mxu0 %v147
    %684 = vmatpush.bf16.msra.mxu0 %v146
    %685 = vmatmul.bf16.gmra.mxu0 %v669
    %v686 = vpop.f32.mrf.mxu0
    %v687 = vadd.f32 %v134, %v686
    %v688 = vpop.f32.mrf.mxu0
    %v689 = vadd.f32 %v134, %v688
    %690 = vmatmul.bf16.gmra.mxu0 %v672
    %v691 = vpop.f32.mrf.mxu0
    %v692 = vadd.f32 %v134, %v691
    %v693 = vpop.f32.mrf.mxu0
    %v694 = vadd.f32 %v134, %v693
    %695 = vmatmul.bf16.gmra.mxu0 %v675
    %v696 = vpop.f32.mrf.mxu0
    %v697 = vadd.f32 %v134, %v696
    %v698 = vpop.f32.mrf.mxu0
    %v699 = vadd.f32 %v134, %v698
    %700 = vdwg.mxu0
    %v701 = vpack.c.bf16 %v689, %v687
    %v702 = vpack.c.bf16 %v694, %v692
    %v703 = vpack.c.bf16 %v699, %v697
    %v705 = vsel %vm80, %v701, 0
    %v708 = vsel %vm80, %v702, 0
    %v711 = vsel %vm80, %v703, 0
    %713 = vmatpush.bf16.msra.mxu0 0
    %714 = vmatpush.bf16.msra.mxu0 0
    %715 = vmatpush.bf16.msra.mxu0 0
    %716 = vmatpush.bf16.msra.mxu0 0
    %717 = vmatpush.bf16.msra.mxu0 0
    %718 = vmatpush.bf16.msra.mxu0 %v215
    %719 = vmatpush.bf16.msra.mxu0 %v201
    %720 = vmatpush.bf16.msra.mxu0 %v200
    %721 = vmatmul.bf16.gmra.mxu0 %v705
    %v722 = vpop.f32.mrf.mxu0
    %v723 = vadd.f32 %v104, %v722
    %v724 = vpop.f32.mrf.mxu0
    %v725 = vadd.f32 %v106, %v724
    %726 = vmatmul.bf16.gmra.mxu0 %v708
    %v727 = vpop.f32.mrf.mxu0
    %v728 = vadd.f32 %v109, %v727
    %v729 = vpop.f32.mrf.mxu0
    %v730 = vadd.f32 %v111, %v729
    %731 = vmatmul.bf16.gmra.mxu0 %v711
    %v732 = vpop.f32.mrf.mxu0
    %v733 = vadd.f32 %v114, %v732
    %v734 = vpop.f32.mrf.mxu0
    %v735 = vadd.f32 %v116, %v734
    %736 = vdwg.mxu0
    %v737 = vmax.f32 %v723, 0.0
    %v738 = vmax.f32 %v725, 0.0
    %v739 = vmax.f32 %v728, 0.0
    %v740 = vmax.f32 %v730, 0.0
    %v741 = vmax.f32 %v733, 0.0
    %v742 = vmax.f32 %v735, 0.0
    %v743 = vsel %vm247, %v737, 0.0
    %744 = vadd.xlane.f32.xlu0 %v743
    %v745 = vpop.xlane.xlu0 %744
    %v746 = vsel %vm247, %v738, 0.0
    %747 = vadd.xlane.f32.xlu0 %v746
    %v748 = vpop.xlane.xlu0 %747
    %v749 = vsel %vm247, %v739, 0.0
    %750 = vadd.xlane.f32.xlu0 %v749
    %v751 = vpop.xlane.xlu0 %750
    %v752 = vsel %vm247, %v740, 0.0
    %753 = vadd.xlane.f32.xlu0 %v752
    %v754 = vpop.xlane.xlu0 %753
    %v755 = vsel %vm247, %v741, 0.0
    %756 = vadd.xlane.f32.xlu0 %v755
    %v757 = vpop.xlane.xlu0 %756
    %v758 = vsel %vm247, %v742, 0.0
    %759 = vadd.xlane.f32.xlu0 %v758
    %v760 = vpop.xlane.xlu0 %759
    %v761 = vmul.f32 %v745, %v272
    %v762 = vmul.f32 %v748, %v272
    %v763 = vmul.f32 %v751, %v272
    %v764 = vmul.f32 %v754, %v272
    %v765 = vmul.f32 %v757, %v272
    %v766 = vmul.f32 %v760, %v272
    %v767 = vsub.f32 %v737, %v761
    %v768 = vsub.f32 %v738, %v762
    %v769 = vsub.f32 %v739, %v763
    %v770 = vsub.f32 %v740, %v764
    %v771 = vsub.f32 %v741, %v765
    %v772 = vsub.f32 %v742, %v766
    %v773 = vmul.f32 %v767, %v767
    %v774 = vmul.f32 %v768, %v768
    %v775 = vmul.f32 %v769, %v769
    %v776 = vmul.f32 %v770, %v770
    %v777 = vmul.f32 %v771, %v771
    %v778 = vmul.f32 %v772, %v772
    %v779 = vsel %vm247, %v773, 0.0
    %780 = vadd.xlane.f32.xlu0 %v779
    %v781 = vpop.xlane.xlu0 %780
    %v782 = vsel %vm247, %v774, 0.0
    %783 = vadd.xlane.f32.xlu0 %v782
    %v784 = vpop.xlane.xlu0 %783
    %v785 = vsel %vm247, %v775, 0.0
    %786 = vadd.xlane.f32.xlu0 %v785
    %v787 = vpop.xlane.xlu0 %786
    %v788 = vsel %vm247, %v776, 0.0
    %789 = vadd.xlane.f32.xlu0 %v788
    %v790 = vpop.xlane.xlu0 %789
    %v791 = vsel %vm247, %v777, 0.0
    %792 = vadd.xlane.f32.xlu0 %v791
    %v793 = vpop.xlane.xlu0 %792
    %v794 = vsel %vm247, %v778, 0.0
    %795 = vadd.xlane.f32.xlu0 %v794
    %v796 = vpop.xlane.xlu0 %795
    %v797 = vmul.f32 %v781, %v272
    %v798 = vmul.f32 %v784, %v272
    %v799 = vmul.f32 %v787, %v272
    %v800 = vmul.f32 %v790, %v272
    %v801 = vmul.f32 %v793, %v272
    %v802 = vmul.f32 %v796, %v272
    %v803 = vadd.f32 %v797, 1e-05
    %v804 = vadd.f32 %v798, 1e-05
    %v805 = vadd.f32 %v799, 1e-05
    %v806 = vadd.f32 %v800, 1e-05
    %v807 = vadd.f32 %v801, 1e-05
    %v808 = vadd.f32 %v802, 1e-05
    %v809 = vrsqrt.pop %v803
    %v810 = vmul.f32 %v809, %v803
    %v811 = vmul.f32 %v810, %v809
    %v812 = vmul.f32 0.5, %v811
    %v813 = vsub.f32 1.5, %v812
    %v814 = vmul.f32 %v809, %v813
    %vm815 = vweird.f32 %v803
    %vm816 = vweird.f32 %v809
    %vm817 = vmor %vm815, %vm816
    %v818 = vsel %vm817, %v809, %v814
    %v819 = vrsqrt.pop %v804
    %v820 = vmul.f32 %v819, %v804
    %v821 = vmul.f32 %v820, %v819
    %v822 = vmul.f32 0.5, %v821
    %v823 = vsub.f32 1.5, %v822
    %v824 = vmul.f32 %v819, %v823
    %vm825 = vweird.f32 %v804
    %vm826 = vweird.f32 %v819
    %vm827 = vmor %vm825, %vm826
    %v828 = vsel %vm827, %v819, %v824
    %v829 = vrsqrt.pop %v805
    %v830 = vmul.f32 %v829, %v805
    %v831 = vmul.f32 %v830, %v829
    %v832 = vmul.f32 0.5, %v831
    %v833 = vsub.f32 1.5, %v832
    %v834 = vmul.f32 %v829, %v833
    %vm835 = vweird.f32 %v805
    %vm836 = vweird.f32 %v829
    %vm837 = vmor %vm835, %vm836
    %v838 = vsel %vm837, %v829, %v834
    %v839 = vrsqrt.pop %v806
    %v840 = vmul.f32 %v839, %v806
    %v841 = vmul.f32 %v840, %v839
    %v842 = vmul.f32 0.5, %v841
    %v843 = vsub.f32 1.5, %v842
    %v844 = vmul.f32 %v839, %v843
    %vm845 = vweird.f32 %v806
    %vm846 = vweird.f32 %v839
    %vm847 = vmor %vm845, %vm846
    %v848 = vsel %vm847, %v839, %v844
    %v849 = vrsqrt.pop %v807
    %v850 = vmul.f32 %v849, %v807
    %v851 = vmul.f32 %v850, %v849
    %v852 = vmul.f32 0.5, %v851
    %v853 = vsub.f32 1.5, %v852
    %v854 = vmul.f32 %v849, %v853
    %vm855 = vweird.f32 %v807
    %vm856 = vweird.f32 %v849
    %vm857 = vmor %vm855, %vm856
    %v858 = vsel %vm857, %v849, %v854
    %v859 = vrsqrt.pop %v808
    %v860 = vmul.f32 %v859, %v808
    %v861 = vmul.f32 %v860, %v859
    %v862 = vmul.f32 0.5, %v861
    %v863 = vsub.f32 1.5, %v862
    %v864 = vmul.f32 %v859, %v863
    %vm865 = vweird.f32 %v808
    %vm866 = vweird.f32 %v859
    %vm867 = vmor %vm865, %vm866
    %v868 = vsel %vm867, %v859, %v864
    %v869 = vmul.f32 %v767, %v818
    %v870 = vmul.f32 %v768, %v828
    %v871 = vmul.f32 %v769, %v838
    %v872 = vmul.f32 %v770, %v848
    %v873 = vmul.f32 %v771, %v858
    %v874 = vmul.f32 %v772, %v868
    %v875 = vmul.f32 %v869, %v388
    %v876 = vmul.f32 %v870, %v388
    %v877 = vmul.f32 %v871, %v388
    %v878 = vmul.f32 %v872, %v388
    %v879 = vmul.f32 %v873, %v388
    %v880 = vmul.f32 %v874, %v388
    %v881 = vadd.f32 %v646, %v875
    %v882 = vadd.f32 %v647, %v876
    %v883 = vadd.f32 %v648, %v877
    %v884 = vadd.f32 %v649, %v878
    %v885 = vadd.f32 %v650, %v879
    %v886 = vadd.f32 %v651, %v880
    %v887 = vadd.f32 %v881, %v403
    %v888 = vadd.f32 %v882, %v403
    %v889 = vadd.f32 %v883, %v403
    %v890 = vadd.f32 %v884, %v403
    %v891 = vadd.f32 %v885, %v403
    %v892 = vadd.f32 %v886, %v403
    %s893 = scalar_lea.vmem %s0, 144
    %v894 = vld [vmem:[%s893] sm:$0xff]
    %v895 = vld [vmem:[%s893 + $0x8] sm:$0xff]
    %v896 = vld [vmem:[%s893 + $0x10] sm:$0xff]
    %v897 = vld [vmem:[%s893 + $0x18] sm:$0xff]
    %v898 = vld [vmem:[%s893 + $0x20] sm:$0xff]
    %v899 = vld [vmem:[%s893 + $0x28] sm:$0xff]
    %v900 = vsub.f32 %v894, %v34
    %v901 = vsub.f32 %v895, %v35
    %v902 = vsub.f32 %v896, %v36
    %v903 = vsub.f32 %v897, %v37
    %v904 = vsub.f32 %v898, %v38
    %v905 = vsub.f32 %v899, %v39
    %v906 = vpack.c.bf16 %v901, %v900
    %v907 = vpack.c.bf16 %v903, %v902
    %v908 = vpack.c.bf16 %v905, %v904
    %v910 = vsel %vm80, %v906, 0
    %v913 = vsel %vm80, %v907, 0
    %v916 = vsel %vm80, %v908, 0
    %918 = vmatpush.bf16.msra.mxu0 0
    %919 = vmatpush.bf16.msra.mxu0 0
    %920 = vmatpush.bf16.msra.mxu0 0
    %921 = vmatpush.bf16.msra.mxu0 0
    %922 = vmatpush.bf16.msra.mxu0 0
    %923 = vmatpush.bf16.msra.mxu0 %v161
    %924 = vmatpush.bf16.msra.mxu0 %v147
    %925 = vmatpush.bf16.msra.mxu0 %v146
    %926 = vmatmul.bf16.gmra.mxu0 %v910
    %v927 = vpop.f32.mrf.mxu0
    %v928 = vadd.f32 %v134, %v927
    %v929 = vpop.f32.mrf.mxu0
    %v930 = vadd.f32 %v134, %v929
    %931 = vmatmul.bf16.gmra.mxu0 %v913
    %v932 = vpop.f32.mrf.mxu0
    %v933 = vadd.f32 %v134, %v932
    %v934 = vpop.f32.mrf.mxu0
    %v935 = vadd.f32 %v134, %v934
    %936 = vmatmul.bf16.gmra.mxu0 %v916
    %v937 = vpop.f32.mrf.mxu0
    %v938 = vadd.f32 %v134, %v937
    %v939 = vpop.f32.mrf.mxu0
    %v940 = vadd.f32 %v134, %v939
    %941 = vdwg.mxu0
    %v942 = vpack.c.bf16 %v930, %v928
    %v943 = vpack.c.bf16 %v935, %v933
    %v944 = vpack.c.bf16 %v940, %v938
    %v946 = vsel %vm80, %v942, 0
    %v949 = vsel %vm80, %v943, 0
    %v952 = vsel %vm80, %v944, 0
    %954 = vmatpush.bf16.msra.mxu0 0
    %955 = vmatpush.bf16.msra.mxu0 0
    %956 = vmatpush.bf16.msra.mxu0 0
    %957 = vmatpush.bf16.msra.mxu0 0
    %958 = vmatpush.bf16.msra.mxu0 0
    %959 = vmatpush.bf16.msra.mxu0 %v215
    %960 = vmatpush.bf16.msra.mxu0 %v201
    %961 = vmatpush.bf16.msra.mxu0 %v200
    %962 = vmatmul.bf16.gmra.mxu0 %v946
    %v963 = vpop.f32.mrf.mxu0
    %v964 = vadd.f32 %v104, %v963
    %v965 = vpop.f32.mrf.mxu0
    %v966 = vadd.f32 %v106, %v965
    %967 = vmatmul.bf16.gmra.mxu0 %v949
    %v968 = vpop.f32.mrf.mxu0
    %v969 = vadd.f32 %v109, %v968
    %v970 = vpop.f32.mrf.mxu0
    %v971 = vadd.f32 %v111, %v970
    %972 = vmatmul.bf16.gmra.mxu0 %v952
    %v973 = vpop.f32.mrf.mxu0
    %v974 = vadd.f32 %v114, %v973
    %v975 = vpop.f32.mrf.mxu0
    %v976 = vadd.f32 %v116, %v975
    %977 = vdwg.mxu0
    %v978 = vmax.f32 %v964, 0.0
    %v979 = vmax.f32 %v966, 0.0
    %v980 = vmax.f32 %v969, 0.0
    %v981 = vmax.f32 %v971, 0.0
    %v982 = vmax.f32 %v974, 0.0
    %v983 = vmax.f32 %v976, 0.0
    %v984 = vsel %vm247, %v978, 0.0
    %985 = vadd.xlane.f32.xlu0 %v984
    %v986 = vpop.xlane.xlu0 %985
    %v987 = vsel %vm247, %v979, 0.0
    %988 = vadd.xlane.f32.xlu0 %v987
    %v989 = vpop.xlane.xlu0 %988
    %v990 = vsel %vm247, %v980, 0.0
    %991 = vadd.xlane.f32.xlu0 %v990
    %v992 = vpop.xlane.xlu0 %991
    %v993 = vsel %vm247, %v981, 0.0
    %994 = vadd.xlane.f32.xlu0 %v993
    %v995 = vpop.xlane.xlu0 %994
    %v996 = vsel %vm247, %v982, 0.0
    %997 = vadd.xlane.f32.xlu0 %v996
    %v998 = vpop.xlane.xlu0 %997
    %v999 = vsel %vm247, %v983, 0.0
    %1000 = vadd.xlane.f32.xlu0 %v999
    %v1001 = vpop.xlane.xlu0 %1000
    %v1002 = vmul.f32 %v986, %v272
    %v1003 = vmul.f32 %v989, %v272
    %v1004 = vmul.f32 %v992, %v272
    %v1005 = vmul.f32 %v995, %v272
    %v1006 = vmul.f32 %v998, %v272
    %v1007 = vmul.f32 %v1001, %v272
    %v1008 = vsub.f32 %v978, %v1002
    %v1009 = vsub.f32 %v979, %v1003
    %v1010 = vsub.f32 %v980, %v1004
    %v1011 = vsub.f32 %v981, %v1005
    %v1012 = vsub.f32 %v982, %v1006
    %v1013 = vsub.f32 %v983, %v1007
    %v1014 = vmul.f32 %v1008, %v1008
    %v1015 = vmul.f32 %v1009, %v1009
    %v1016 = vmul.f32 %v1010, %v1010
    %v1017 = vmul.f32 %v1011, %v1011
    %v1018 = vmul.f32 %v1012, %v1012
    %v1019 = vmul.f32 %v1013, %v1013
    %v1020 = vsel %vm247, %v1014, 0.0
    %1021 = vadd.xlane.f32.xlu0 %v1020
    %v1022 = vpop.xlane.xlu0 %1021
    %v1023 = vsel %vm247, %v1015, 0.0
    %1024 = vadd.xlane.f32.xlu0 %v1023
    %v1025 = vpop.xlane.xlu0 %1024
    %v1026 = vsel %vm247, %v1016, 0.0
    %1027 = vadd.xlane.f32.xlu0 %v1026
    %v1028 = vpop.xlane.xlu0 %1027
    %v1029 = vsel %vm247, %v1017, 0.0
    %1030 = vadd.xlane.f32.xlu0 %v1029
    %v1031 = vpop.xlane.xlu0 %1030
    %v1032 = vsel %vm247, %v1018, 0.0
    %1033 = vadd.xlane.f32.xlu0 %v1032
    %v1034 = vpop.xlane.xlu0 %1033
    %v1035 = vsel %vm247, %v1019, 0.0
    %1036 = vadd.xlane.f32.xlu0 %v1035
    %v1037 = vpop.xlane.xlu0 %1036
    %v1038 = vmul.f32 %v1022, %v272
    %v1039 = vmul.f32 %v1025, %v272
    %v1040 = vmul.f32 %v1028, %v272
    %v1041 = vmul.f32 %v1031, %v272
    %v1042 = vmul.f32 %v1034, %v272
    %v1043 = vmul.f32 %v1037, %v272
    %v1044 = vadd.f32 %v1038, 1e-05
    %v1045 = vadd.f32 %v1039, 1e-05
    %v1046 = vadd.f32 %v1040, 1e-05
    %v1047 = vadd.f32 %v1041, 1e-05
    %v1048 = vadd.f32 %v1042, 1e-05
    %v1049 = vadd.f32 %v1043, 1e-05
    %v1050 = vrsqrt.pop %v1044
    %v1051 = vmul.f32 %v1050, %v1044
    %v1052 = vmul.f32 %v1051, %v1050
    %v1053 = vmul.f32 0.5, %v1052
    %v1054 = vsub.f32 1.5, %v1053
    %v1055 = vmul.f32 %v1050, %v1054
    %vm1056 = vweird.f32 %v1044
    %vm1057 = vweird.f32 %v1050
    %vm1058 = vmor %vm1056, %vm1057
    %v1059 = vsel %vm1058, %v1050, %v1055
    %v1060 = vrsqrt.pop %v1045
    %v1061 = vmul.f32 %v1060, %v1045
    %v1062 = vmul.f32 %v1061, %v1060
    %v1063 = vmul.f32 0.5, %v1062
    %v1064 = vsub.f32 1.5, %v1063
    %v1065 = vmul.f32 %v1060, %v1064
    %vm1066 = vweird.f32 %v1045
    %vm1067 = vweird.f32 %v1060
    %vm1068 = vmor %vm1066, %vm1067
    %v1069 = vsel %vm1068, %v1060, %v1065
    %v1070 = vrsqrt.pop %v1046
    %v1071 = vmul.f32 %v1070, %v1046
    %v1072 = vmul.f32 %v1071, %v1070
    %v1073 = vmul.f32 0.5, %v1072
    %v1074 = vsub.f32 1.5, %v1073
    %v1075 = vmul.f32 %v1070, %v1074
    %vm1076 = vweird.f32 %v1046
    %vm1077 = vweird.f32 %v1070
    %vm1078 = vmor %vm1076, %vm1077
    %v1079 = vsel %vm1078, %v1070, %v1075
    %v1080 = vrsqrt.pop %v1047
    %v1081 = vmul.f32 %v1080, %v1047
    %v1082 = vmul.f32 %v1081, %v1080
    %v1083 = vmul.f32 0.5, %v1082
    %v1084 = vsub.f32 1.5, %v1083
    %v1085 = vmul.f32 %v1080, %v1084
    %vm1086 = vweird.f32 %v1047
    %vm1087 = vweird.f32 %v1080
    %vm1088 = vmor %vm1086, %vm1087
    %v1089 = vsel %vm1088, %v1080, %v1085
    %v1090 = vrsqrt.pop %v1048
    %v1091 = vmul.f32 %v1090, %v1048
    %v1092 = vmul.f32 %v1091, %v1090
    %v1093 = vmul.f32 0.5, %v1092
    %v1094 = vsub.f32 1.5, %v1093
    %v1095 = vmul.f32 %v1090, %v1094
    %vm1096 = vweird.f32 %v1048
    %vm1097 = vweird.f32 %v1090
    %vm1098 = vmor %vm1096, %vm1097
    %v1099 = vsel %vm1098, %v1090, %v1095
    %v1100 = vrsqrt.pop %v1049
    %v1101 = vmul.f32 %v1100, %v1049
    %v1102 = vmul.f32 %v1101, %v1100
    %v1103 = vmul.f32 0.5, %v1102
    %v1104 = vsub.f32 1.5, %v1103
    %v1105 = vmul.f32 %v1100, %v1104
    %vm1106 = vweird.f32 %v1049
    %vm1107 = vweird.f32 %v1100
    %vm1108 = vmor %vm1106, %vm1107
    %v1109 = vsel %vm1108, %v1100, %v1105
    %v1110 = vmul.f32 %v1008, %v1059
    %v1111 = vmul.f32 %v1009, %v1069
    %v1112 = vmul.f32 %v1010, %v1079
    %v1113 = vmul.f32 %v1011, %v1089
    %v1114 = vmul.f32 %v1012, %v1099
    %v1115 = vmul.f32 %v1013, %v1109
    %v1116 = vmul.f32 %v1110, %v388
    %v1117 = vmul.f32 %v1111, %v388
    %v1118 = vmul.f32 %v1112, %v388
    %v1119 = vmul.f32 %v1113, %v388
    %v1120 = vmul.f32 %v1114, %v388
    %v1121 = vmul.f32 %v1115, %v388
    %v1122 = vadd.f32 %v887, %v1116
    %v1123 = vadd.f32 %v888, %v1117
    %v1124 = vadd.f32 %v889, %v1118
    %v1125 = vadd.f32 %v890, %v1119
    %v1126 = vadd.f32 %v891, %v1120
    %v1127 = vadd.f32 %v892, %v1121
    %v1128 = vadd.f32 %v1122, %v403
    %v1129 = vadd.f32 %v1123, %v403
    %v1130 = vadd.f32 %v1124, %v403
    %v1131 = vadd.f32 %v1125, %v403
    %v1132 = vadd.f32 %v1126, %v403
    %v1133 = vadd.f32 %v1127, %v403
    %s1134 = scalar_lea.vmem %s0, 192
    %v1135 = vld [vmem:[%s1134] sm:$0xff]
    %v1136 = vld [vmem:[%s1134 + $0x8] sm:$0xff]
    %v1137 = vld [vmem:[%s1134 + $0x10] sm:$0xff]
    %v1138 = vld [vmem:[%s1134 + $0x18] sm:$0xff]
    %v1139 = vld [vmem:[%s1134 + $0x20] sm:$0xff]
    %v1140 = vld [vmem:[%s1134 + $0x28] sm:$0xff]
    %v1141 = vsub.f32 %v1135, %v34
    %v1142 = vsub.f32 %v1136, %v35
    %v1143 = vsub.f32 %v1137, %v36
    %v1144 = vsub.f32 %v1138, %v37
    %v1145 = vsub.f32 %v1139, %v38
    %v1146 = vsub.f32 %v1140, %v39
    %v1147 = vpack.c.bf16 %v1142, %v1141
    %v1148 = vpack.c.bf16 %v1144, %v1143
    %v1149 = vpack.c.bf16 %v1146, %v1145
    %v1151 = vsel %vm80, %v1147, 0
    %v1154 = vsel %vm80, %v1148, 0
    %v1157 = vsel %vm80, %v1149, 0
    %1159 = vmatpush.bf16.msra.mxu0 0
    %1160 = vmatpush.bf16.msra.mxu0 0
    %1161 = vmatpush.bf16.msra.mxu0 0
    %1162 = vmatpush.bf16.msra.mxu0 0
    %1163 = vmatpush.bf16.msra.mxu0 0
    %1164 = vmatpush.bf16.msra.mxu0 %v161
    %1165 = vmatpush.bf16.msra.mxu0 %v147
    %1166 = vmatpush.bf16.msra.mxu0 %v146
    %1167 = vmatmul.bf16.gmra.mxu0 %v1151
    %v1168 = vpop.f32.mrf.mxu0
    %v1169 = vadd.f32 %v134, %v1168
    %v1170 = vpop.f32.mrf.mxu0
    %v1171 = vadd.f32 %v134, %v1170
    %1172 = vmatmul.bf16.gmra.mxu0 %v1154
    %v1173 = vpop.f32.mrf.mxu0
    %v1174 = vadd.f32 %v134, %v1173
    %v1175 = vpop.f32.mrf.mxu0
    %v1176 = vadd.f32 %v134, %v1175
    %1177 = vmatmul.bf16.gmra.mxu0 %v1157
    %v1178 = vpop.f32.mrf.mxu0
    %v1179 = vadd.f32 %v134, %v1178
    %v1180 = vpop.f32.mrf.mxu0
    %v1181 = vadd.f32 %v134, %v1180
    %1182 = vdwg.mxu0
    %v1183 = vpack.c.bf16 %v1171, %v1169
    %v1184 = vpack.c.bf16 %v1176, %v1174
    %v1185 = vpack.c.bf16 %v1181, %v1179
    %v1187 = vsel %vm80, %v1183, 0
    %v1190 = vsel %vm80, %v1184, 0
    %v1193 = vsel %vm80, %v1185, 0
    %1195 = vmatpush.bf16.msra.mxu0 0
    %1196 = vmatpush.bf16.msra.mxu0 0
    %1197 = vmatpush.bf16.msra.mxu0 0
    %1198 = vmatpush.bf16.msra.mxu0 0
    %1199 = vmatpush.bf16.msra.mxu0 0
    %1200 = vmatpush.bf16.msra.mxu0 %v215
    %1201 = vmatpush.bf16.msra.mxu0 %v201
    %1202 = vmatpush.bf16.msra.mxu0 %v200
    %1203 = vmatmul.bf16.gmra.mxu0 %v1187
    %v1204 = vpop.f32.mrf.mxu0
    %v1205 = vadd.f32 %v104, %v1204
    %v1206 = vpop.f32.mrf.mxu0
    %v1207 = vadd.f32 %v106, %v1206
    %1208 = vmatmul.bf16.gmra.mxu0 %v1190
    %v1209 = vpop.f32.mrf.mxu0
    %v1210 = vadd.f32 %v109, %v1209
    %v1211 = vpop.f32.mrf.mxu0
    %v1212 = vadd.f32 %v111, %v1211
    %1213 = vmatmul.bf16.gmra.mxu0 %v1193
    %v1214 = vpop.f32.mrf.mxu0
    %v1215 = vadd.f32 %v114, %v1214
    %v1216 = vpop.f32.mrf.mxu0
    %v1217 = vadd.f32 %v116, %v1216
    %1218 = vdwg.mxu0
    %v1219 = vmax.f32 %v1205, 0.0
    %v1220 = vmax.f32 %v1207, 0.0
    %v1221 = vmax.f32 %v1210, 0.0
    %v1222 = vmax.f32 %v1212, 0.0
    %v1223 = vmax.f32 %v1215, 0.0
    %v1224 = vmax.f32 %v1217, 0.0
    %v1225 = vsel %vm247, %v1219, 0.0
    %1226 = vadd.xlane.f32.xlu0 %v1225
    %v1227 = vpop.xlane.xlu0 %1226
    %v1228 = vsel %vm247, %v1220, 0.0
    %1229 = vadd.xlane.f32.xlu0 %v1228
    %v1230 = vpop.xlane.xlu0 %1229
    %v1231 = vsel %vm247, %v1221, 0.0
    %1232 = vadd.xlane.f32.xlu0 %v1231
    %v1233 = vpop.xlane.xlu0 %1232
    %v1234 = vsel %vm247, %v1222, 0.0
    %1235 = vadd.xlane.f32.xlu0 %v1234
    %v1236 = vpop.xlane.xlu0 %1235
    %v1237 = vsel %vm247, %v1223, 0.0
    %1238 = vadd.xlane.f32.xlu0 %v1237
    %v1239 = vpop.xlane.xlu0 %1238
    %v1240 = vsel %vm247, %v1224, 0.0
    %1241 = vadd.xlane.f32.xlu0 %v1240
    %v1242 = vpop.xlane.xlu0 %1241
    %v1243 = vmul.f32 %v1227, %v272
    %v1244 = vmul.f32 %v1230, %v272
    %v1245 = vmul.f32 %v1233, %v272
    %v1246 = vmul.f32 %v1236, %v272
    %v1247 = vmul.f32 %v1239, %v272
    %v1248 = vmul.f32 %v1242, %v272
    %v1249 = vsub.f32 %v1219, %v1243
    %v1250 = vsub.f32 %v1220, %v1244
    %v1251 = vsub.f32 %v1221, %v1245
    %v1252 = vsub.f32 %v1222, %v1246
    %v1253 = vsub.f32 %v1223, %v1247
    %v1254 = vsub.f32 %v1224, %v1248
    %v1255 = vmul.f32 %v1249, %v1249
    %v1256 = vmul.f32 %v1250, %v1250
    %v1257 = vmul.f32 %v1251, %v1251
    %v1258 = vmul.f32 %v1252, %v1252
    %v1259 = vmul.f32 %v1253, %v1253
    %v1260 = vmul.f32 %v1254, %v1254
    %v1261 = vsel %vm247, %v1255, 0.0
    %1262 = vadd.xlane.f32.xlu0 %v1261
    %v1263 = vpop.xlane.xlu0 %1262
    %v1264 = vsel %vm247, %v1256, 0.0
    %1265 = vadd.xlane.f32.xlu0 %v1264
    %v1266 = vpop.xlane.xlu0 %1265
    %v1267 = vsel %vm247, %v1257, 0.0
    %1268 = vadd.xlane.f32.xlu0 %v1267
    %v1269 = vpop.xlane.xlu0 %1268
    %v1270 = vsel %vm247, %v1258, 0.0
    %1271 = vadd.xlane.f32.xlu0 %v1270
    %v1272 = vpop.xlane.xlu0 %1271
    %v1273 = vsel %vm247, %v1259, 0.0
    %1274 = vadd.xlane.f32.xlu0 %v1273
    %v1275 = vpop.xlane.xlu0 %1274
    %v1276 = vsel %vm247, %v1260, 0.0
    %1277 = vadd.xlane.f32.xlu0 %v1276
    %v1278 = vpop.xlane.xlu0 %1277
    %v1279 = vmul.f32 %v1263, %v272
    %v1280 = vmul.f32 %v1266, %v272
    %v1281 = vmul.f32 %v1269, %v272
    %v1282 = vmul.f32 %v1272, %v272
    %v1283 = vmul.f32 %v1275, %v272
    %v1284 = vmul.f32 %v1278, %v272
    %v1285 = vadd.f32 %v1279, 1e-05
    %v1286 = vadd.f32 %v1280, 1e-05
    %v1287 = vadd.f32 %v1281, 1e-05
    %v1288 = vadd.f32 %v1282, 1e-05
    %v1289 = vadd.f32 %v1283, 1e-05
    %v1290 = vadd.f32 %v1284, 1e-05
    %v1291 = vrsqrt.pop %v1285
    %v1292 = vmul.f32 %v1291, %v1285
    %v1293 = vmul.f32 %v1292, %v1291
    %v1294 = vmul.f32 0.5, %v1293
    %v1295 = vsub.f32 1.5, %v1294
    %v1296 = vmul.f32 %v1291, %v1295
    %vm1297 = vweird.f32 %v1285
    %vm1298 = vweird.f32 %v1291
    %vm1299 = vmor %vm1297, %vm1298
    %v1300 = vsel %vm1299, %v1291, %v1296
    %v1301 = vrsqrt.pop %v1286
    %v1302 = vmul.f32 %v1301, %v1286
    %v1303 = vmul.f32 %v1302, %v1301
    %v1304 = vmul.f32 0.5, %v1303
    %v1305 = vsub.f32 1.5, %v1304
    %v1306 = vmul.f32 %v1301, %v1305
    %vm1307 = vweird.f32 %v1286
    %vm1308 = vweird.f32 %v1301
    %vm1309 = vmor %vm1307, %vm1308
    %v1310 = vsel %vm1309, %v1301, %v1306
    %v1311 = vrsqrt.pop %v1287
    %v1312 = vmul.f32 %v1311, %v1287
    %v1313 = vmul.f32 %v1312, %v1311
    %v1314 = vmul.f32 0.5, %v1313
    %v1315 = vsub.f32 1.5, %v1314
    %v1316 = vmul.f32 %v1311, %v1315
    %vm1317 = vweird.f32 %v1287
    %vm1318 = vweird.f32 %v1311
    %vm1319 = vmor %vm1317, %vm1318
    %v1320 = vsel %vm1319, %v1311, %v1316
    %v1321 = vrsqrt.pop %v1288
    %v1322 = vmul.f32 %v1321, %v1288
    %v1323 = vmul.f32 %v1322, %v1321
    %v1324 = vmul.f32 0.5, %v1323
    %v1325 = vsub.f32 1.5, %v1324
    %v1326 = vmul.f32 %v1321, %v1325
    %vm1327 = vweird.f32 %v1288
    %vm1328 = vweird.f32 %v1321
    %vm1329 = vmor %vm1327, %vm1328
    %v1330 = vsel %vm1329, %v1321, %v1326
    %v1331 = vrsqrt.pop %v1289
    %v1332 = vmul.f32 %v1331, %v1289
    %v1333 = vmul.f32 %v1332, %v1331
    %v1334 = vmul.f32 0.5, %v1333
    %v1335 = vsub.f32 1.5, %v1334
    %v1336 = vmul.f32 %v1331, %v1335
    %vm1337 = vweird.f32 %v1289
    %vm1338 = vweird.f32 %v1331
    %vm1339 = vmor %vm1337, %vm1338
    %v1340 = vsel %vm1339, %v1331, %v1336
    %v1341 = vrsqrt.pop %v1290
    %v1342 = vmul.f32 %v1341, %v1290
    %v1343 = vmul.f32 %v1342, %v1341
    %v1344 = vmul.f32 0.5, %v1343
    %v1345 = vsub.f32 1.5, %v1344
    %v1346 = vmul.f32 %v1341, %v1345
    %vm1347 = vweird.f32 %v1290
    %vm1348 = vweird.f32 %v1341
    %vm1349 = vmor %vm1347, %vm1348
    %v1350 = vsel %vm1349, %v1341, %v1346
    %v1351 = vmul.f32 %v1249, %v1300
    %v1352 = vmul.f32 %v1250, %v1310
    %v1353 = vmul.f32 %v1251, %v1320
    %v1354 = vmul.f32 %v1252, %v1330
    %v1355 = vmul.f32 %v1253, %v1340
    %v1356 = vmul.f32 %v1254, %v1350
    %v1357 = vmul.f32 %v1351, %v388
    %v1358 = vmul.f32 %v1352, %v388
    %v1359 = vmul.f32 %v1353, %v388
    %v1360 = vmul.f32 %v1354, %v388
    %v1361 = vmul.f32 %v1355, %v388
    %v1362 = vmul.f32 %v1356, %v388
    %v1363 = vadd.f32 %v1128, %v1357
    %v1364 = vadd.f32 %v1129, %v1358
    %v1365 = vadd.f32 %v1130, %v1359
    %v1366 = vadd.f32 %v1131, %v1360
    %v1367 = vadd.f32 %v1132, %v1361
    %v1368 = vadd.f32 %v1133, %v1362
    %v1369 = vadd.f32 %v1363, %v403
    %v1370 = vadd.f32 %v1364, %v403
    %v1371 = vadd.f32 %v1365, %v403
    %v1372 = vadd.f32 %v1366, %v403
    %v1373 = vadd.f32 %v1367, %v403
    %v1374 = vadd.f32 %v1368, %v403
    %s1375 = scalar_lea.vmem %s0, 240
    %v1376 = vld [vmem:[%s1375] sm:$0xff]
    %v1377 = vld [vmem:[%s1375 + $0x8] sm:$0xff]
    %v1378 = vld [vmem:[%s1375 + $0x10] sm:$0xff]
    %v1379 = vld [vmem:[%s1375 + $0x18] sm:$0xff]
    %v1380 = vld [vmem:[%s1375 + $0x20] sm:$0xff]
    %v1381 = vld [vmem:[%s1375 + $0x28] sm:$0xff]
    %v1382 = vsub.f32 %v1376, %v34
    %v1383 = vsub.f32 %v1377, %v35
    %v1384 = vsub.f32 %v1378, %v36
    %v1385 = vsub.f32 %v1379, %v37
    %v1386 = vsub.f32 %v1380, %v38
    %v1387 = vsub.f32 %v1381, %v39
    %v1388 = vpack.c.bf16 %v1383, %v1382
    %v1389 = vpack.c.bf16 %v1385, %v1384
    %v1390 = vpack.c.bf16 %v1387, %v1386
    %v1392 = vsel %vm80, %v1388, 0
    %v1395 = vsel %vm80, %v1389, 0
    %v1398 = vsel %vm80, %v1390, 0
    %1400 = vmatpush.bf16.msra.mxu0 0
    %1401 = vmatpush.bf16.msra.mxu0 0
    %1402 = vmatpush.bf16.msra.mxu0 0
    %1403 = vmatpush.bf16.msra.mxu0 0
    %1404 = vmatpush.bf16.msra.mxu0 0
    %1405 = vmatpush.bf16.msra.mxu0 %v161
    %1406 = vmatpush.bf16.msra.mxu0 %v147
    %1407 = vmatpush.bf16.msra.mxu0 %v146
    %1408 = vmatmul.bf16.gmra.mxu0 %v1392
    %v1409 = vpop.f32.mrf.mxu0
    %v1410 = vadd.f32 %v134, %v1409
    %v1411 = vpop.f32.mrf.mxu0
    %v1412 = vadd.f32 %v134, %v1411
    %1413 = vmatmul.bf16.gmra.mxu0 %v1395
    %v1414 = vpop.f32.mrf.mxu0
    %v1415 = vadd.f32 %v134, %v1414
    %v1416 = vpop.f32.mrf.mxu0
    %v1417 = vadd.f32 %v134, %v1416
    %1418 = vmatmul.bf16.gmra.mxu0 %v1398
    %v1419 = vpop.f32.mrf.mxu0
    %v1420 = vadd.f32 %v134, %v1419
    %v1421 = vpop.f32.mrf.mxu0
    %v1422 = vadd.f32 %v134, %v1421
    %1423 = vdwg.mxu0
    %v1424 = vpack.c.bf16 %v1412, %v1410
    %v1425 = vpack.c.bf16 %v1417, %v1415
    %v1426 = vpack.c.bf16 %v1422, %v1420
    %v1428 = vsel %vm80, %v1424, 0
    %v1431 = vsel %vm80, %v1425, 0
    %v1434 = vsel %vm80, %v1426, 0
    %1436 = vmatpush.bf16.msra.mxu0 0
    %1437 = vmatpush.bf16.msra.mxu0 0
    %1438 = vmatpush.bf16.msra.mxu0 0
    %1439 = vmatpush.bf16.msra.mxu0 0
    %1440 = vmatpush.bf16.msra.mxu0 0
    %1441 = vmatpush.bf16.msra.mxu0 %v215
    %1442 = vmatpush.bf16.msra.mxu0 %v201
    %1443 = vmatpush.bf16.msra.mxu0 %v200
    %1444 = vmatmul.bf16.gmra.mxu0 %v1428
    %v1445 = vpop.f32.mrf.mxu0
    %v1446 = vadd.f32 %v104, %v1445
    %v1447 = vpop.f32.mrf.mxu0
    %v1448 = vadd.f32 %v106, %v1447
    %1449 = vmatmul.bf16.gmra.mxu0 %v1431
    %v1450 = vpop.f32.mrf.mxu0
    %v1451 = vadd.f32 %v109, %v1450
    %v1452 = vpop.f32.mrf.mxu0
    %v1453 = vadd.f32 %v111, %v1452
    %1454 = vmatmul.bf16.gmra.mxu0 %v1434
    %v1455 = vpop.f32.mrf.mxu0
    %v1456 = vadd.f32 %v114, %v1455
    %v1457 = vpop.f32.mrf.mxu0
    %v1458 = vadd.f32 %v116, %v1457
    %1459 = vdwg.mxu0
    %v1460 = vmax.f32 %v1446, 0.0
    %v1461 = vmax.f32 %v1448, 0.0
    %v1462 = vmax.f32 %v1451, 0.0
    %v1463 = vmax.f32 %v1453, 0.0
    %v1464 = vmax.f32 %v1456, 0.0
    %v1465 = vmax.f32 %v1458, 0.0
    %v1466 = vsel %vm247, %v1460, 0.0
    %1467 = vadd.xlane.f32.xlu0 %v1466
    %v1468 = vpop.xlane.xlu0 %1467
    %v1469 = vsel %vm247, %v1461, 0.0
    %1470 = vadd.xlane.f32.xlu0 %v1469
    %v1471 = vpop.xlane.xlu0 %1470
    %v1472 = vsel %vm247, %v1462, 0.0
    %1473 = vadd.xlane.f32.xlu0 %v1472
    %v1474 = vpop.xlane.xlu0 %1473
    %v1475 = vsel %vm247, %v1463, 0.0
    %1476 = vadd.xlane.f32.xlu0 %v1475
    %v1477 = vpop.xlane.xlu0 %1476
    %v1478 = vsel %vm247, %v1464, 0.0
    %1479 = vadd.xlane.f32.xlu0 %v1478
    %v1480 = vpop.xlane.xlu0 %1479
    %v1481 = vsel %vm247, %v1465, 0.0
    %1482 = vadd.xlane.f32.xlu0 %v1481
    %v1483 = vpop.xlane.xlu0 %1482
    %v1484 = vmul.f32 %v1468, %v272
    %v1485 = vmul.f32 %v1471, %v272
    %v1486 = vmul.f32 %v1474, %v272
    %v1487 = vmul.f32 %v1477, %v272
    %v1488 = vmul.f32 %v1480, %v272
    %v1489 = vmul.f32 %v1483, %v272
    %v1490 = vsub.f32 %v1460, %v1484
    %v1491 = vsub.f32 %v1461, %v1485
    %v1492 = vsub.f32 %v1462, %v1486
    %v1493 = vsub.f32 %v1463, %v1487
    %v1494 = vsub.f32 %v1464, %v1488
    %v1495 = vsub.f32 %v1465, %v1489
    %v1496 = vmul.f32 %v1490, %v1490
    %v1497 = vmul.f32 %v1491, %v1491
    %v1498 = vmul.f32 %v1492, %v1492
    %v1499 = vmul.f32 %v1493, %v1493
    %v1500 = vmul.f32 %v1494, %v1494
    %v1501 = vmul.f32 %v1495, %v1495
    %v1502 = vsel %vm247, %v1496, 0.0
    %1503 = vadd.xlane.f32.xlu0 %v1502
    %v1504 = vpop.xlane.xlu0 %1503
    %v1505 = vsel %vm247, %v1497, 0.0
    %1506 = vadd.xlane.f32.xlu0 %v1505
    %v1507 = vpop.xlane.xlu0 %1506
    %v1508 = vsel %vm247, %v1498, 0.0
    %1509 = vadd.xlane.f32.xlu0 %v1508
    %v1510 = vpop.xlane.xlu0 %1509
    %v1511 = vsel %vm247, %v1499, 0.0
    %1512 = vadd.xlane.f32.xlu0 %v1511
    %v1513 = vpop.xlane.xlu0 %1512
    %v1514 = vsel %vm247, %v1500, 0.0
    %1515 = vadd.xlane.f32.xlu0 %v1514
    %v1516 = vpop.xlane.xlu0 %1515
    %v1517 = vsel %vm247, %v1501, 0.0
    %1518 = vadd.xlane.f32.xlu0 %v1517
    %v1519 = vpop.xlane.xlu0 %1518
    %v1520 = vmul.f32 %v1504, %v272
    %v1521 = vmul.f32 %v1507, %v272
    %v1522 = vmul.f32 %v1510, %v272
    %v1523 = vmul.f32 %v1513, %v272
    %v1524 = vmul.f32 %v1516, %v272
    %v1525 = vmul.f32 %v1519, %v272
    %v1526 = vadd.f32 %v1520, 1e-05
    %v1527 = vadd.f32 %v1521, 1e-05
    %v1528 = vadd.f32 %v1522, 1e-05
    %v1529 = vadd.f32 %v1523, 1e-05
    %v1530 = vadd.f32 %v1524, 1e-05
    %v1531 = vadd.f32 %v1525, 1e-05
    %v1532 = vrsqrt.pop %v1526
    %v1533 = vmul.f32 %v1532, %v1526
    %v1534 = vmul.f32 %v1533, %v1532
    %v1535 = vmul.f32 0.5, %v1534
    %v1536 = vsub.f32 1.5, %v1535
    %v1537 = vmul.f32 %v1532, %v1536
    %vm1538 = vweird.f32 %v1526
    %vm1539 = vweird.f32 %v1532
    %vm1540 = vmor %vm1538, %vm1539
    %v1541 = vsel %vm1540, %v1532, %v1537
    %v1542 = vrsqrt.pop %v1527
    %v1543 = vmul.f32 %v1542, %v1527
    %v1544 = vmul.f32 %v1543, %v1542
    %v1545 = vmul.f32 0.5, %v1544
    %v1546 = vsub.f32 1.5, %v1545
    %v1547 = vmul.f32 %v1542, %v1546
    %vm1548 = vweird.f32 %v1527
    %vm1549 = vweird.f32 %v1542
    %vm1550 = vmor %vm1548, %vm1549
    %v1551 = vsel %vm1550, %v1542, %v1547
    %v1552 = vrsqrt.pop %v1528
    %v1553 = vmul.f32 %v1552, %v1528
    %v1554 = vmul.f32 %v1553, %v1552
    %v1555 = vmul.f32 0.5, %v1554
    %v1556 = vsub.f32 1.5, %v1555
    %v1557 = vmul.f32 %v1552, %v1556
    %vm1558 = vweird.f32 %v1528
    %vm1559 = vweird.f32 %v1552
    %vm1560 = vmor %vm1558, %vm1559
    %v1561 = vsel %vm1560, %v1552, %v1557
    %v1562 = vrsqrt.pop %v1529
    %v1563 = vmul.f32 %v1562, %v1529
    %v1564 = vmul.f32 %v1563, %v1562
    %v1565 = vmul.f32 0.5, %v1564
    %v1566 = vsub.f32 1.5, %v1565
    %v1567 = vmul.f32 %v1562, %v1566
    %vm1568 = vweird.f32 %v1529
    %vm1569 = vweird.f32 %v1562
    %vm1570 = vmor %vm1568, %vm1569
    %v1571 = vsel %vm1570, %v1562, %v1567
    %v1572 = vrsqrt.pop %v1530
    %v1573 = vmul.f32 %v1572, %v1530
    %v1574 = vmul.f32 %v1573, %v1572
    %v1575 = vmul.f32 0.5, %v1574
    %v1576 = vsub.f32 1.5, %v1575
    %v1577 = vmul.f32 %v1572, %v1576
    %vm1578 = vweird.f32 %v1530
    %vm1579 = vweird.f32 %v1572
    %vm1580 = vmor %vm1578, %vm1579
    %v1581 = vsel %vm1580, %v1572, %v1577
    %v1582 = vrsqrt.pop %v1531
    %v1583 = vmul.f32 %v1582, %v1531
    %v1584 = vmul.f32 %v1583, %v1582
    %v1585 = vmul.f32 0.5, %v1584
    %v1586 = vsub.f32 1.5, %v1585
    %v1587 = vmul.f32 %v1582, %v1586
    %vm1588 = vweird.f32 %v1531
    %vm1589 = vweird.f32 %v1582
    %vm1590 = vmor %vm1588, %vm1589
    %v1591 = vsel %vm1590, %v1582, %v1587
    %v1592 = vmul.f32 %v1490, %v1541
    %v1593 = vmul.f32 %v1491, %v1551
    %v1594 = vmul.f32 %v1492, %v1561
    %v1595 = vmul.f32 %v1493, %v1571
    %v1596 = vmul.f32 %v1494, %v1581
    %v1597 = vmul.f32 %v1495, %v1591
    %v1598 = vmul.f32 %v1592, %v388
    %v1599 = vmul.f32 %v1593, %v388
    %v1600 = vmul.f32 %v1594, %v388
    %v1601 = vmul.f32 %v1595, %v388
    %v1602 = vmul.f32 %v1596, %v388
    %v1603 = vmul.f32 %v1597, %v388
    %v1604 = vadd.f32 %v1369, %v1598
    %v1605 = vadd.f32 %v1370, %v1599
    %v1606 = vadd.f32 %v1371, %v1600
    %v1607 = vadd.f32 %v1372, %v1601
    %v1608 = vadd.f32 %v1373, %v1602
    %v1609 = vadd.f32 %v1374, %v1603
    %v1610 = vadd.f32 %v1604, %v403
    %v1611 = vadd.f32 %v1605, %v403
    %v1612 = vadd.f32 %v1606, %v403
    %v1613 = vadd.f32 %v1607, %v403
    %v1614 = vadd.f32 %v1608, %v403
    %v1615 = vadd.f32 %v1609, %v403
    %s1616 = scalar_lea.vmem %s0, 288
    %v1617 = vld [vmem:[%s1616] sm:$0xff]
    %v1618 = vld [vmem:[%s1616 + $0x8] sm:$0xff]
    %v1619 = vld [vmem:[%s1616 + $0x10] sm:$0xff]
    %v1620 = vld [vmem:[%s1616 + $0x18] sm:$0xff]
    %v1621 = vld [vmem:[%s1616 + $0x20] sm:$0xff]
    %v1622 = vld [vmem:[%s1616 + $0x28] sm:$0xff]
    %v1623 = vsub.f32 %v1617, %v34
    %v1624 = vsub.f32 %v1618, %v35
    %v1625 = vsub.f32 %v1619, %v36
    %v1626 = vsub.f32 %v1620, %v37
    %v1627 = vsub.f32 %v1621, %v38
    %v1628 = vsub.f32 %v1622, %v39
    %v1629 = vpack.c.bf16 %v1624, %v1623
    %v1630 = vpack.c.bf16 %v1626, %v1625
    %v1631 = vpack.c.bf16 %v1628, %v1627
    %v1633 = vsel %vm80, %v1629, 0
    %v1636 = vsel %vm80, %v1630, 0
    %v1639 = vsel %vm80, %v1631, 0
    %1641 = vmatpush.bf16.msra.mxu0 0
    %1642 = vmatpush.bf16.msra.mxu0 0
    %1643 = vmatpush.bf16.msra.mxu0 0
    %1644 = vmatpush.bf16.msra.mxu0 0
    %1645 = vmatpush.bf16.msra.mxu0 0
    %1646 = vmatpush.bf16.msra.mxu0 %v161
    %1647 = vmatpush.bf16.msra.mxu0 %v147
    %1648 = vmatpush.bf16.msra.mxu0 %v146
    %1649 = vmatmul.bf16.gmra.mxu0 %v1633
    %v1650 = vpop.f32.mrf.mxu0
    %v1651 = vadd.f32 %v134, %v1650
    %v1652 = vpop.f32.mrf.mxu0
    %v1653 = vadd.f32 %v134, %v1652
    %1654 = vmatmul.bf16.gmra.mxu0 %v1636
    %v1655 = vpop.f32.mrf.mxu0
    %v1656 = vadd.f32 %v134, %v1655
    %v1657 = vpop.f32.mrf.mxu0
    %v1658 = vadd.f32 %v134, %v1657
    %1659 = vmatmul.bf16.gmra.mxu0 %v1639
    %v1660 = vpop.f32.mrf.mxu0
    %v1661 = vadd.f32 %v134, %v1660
    %v1662 = vpop.f32.mrf.mxu0
    %v1663 = vadd.f32 %v134, %v1662
    %1664 = vdwg.mxu0
    %v1665 = vpack.c.bf16 %v1653, %v1651
    %v1666 = vpack.c.bf16 %v1658, %v1656
    %v1667 = vpack.c.bf16 %v1663, %v1661
    %v1669 = vsel %vm80, %v1665, 0
    %v1672 = vsel %vm80, %v1666, 0
    %v1675 = vsel %vm80, %v1667, 0
    %1677 = vmatpush.bf16.msra.mxu0 0
    %1678 = vmatpush.bf16.msra.mxu0 0
    %1679 = vmatpush.bf16.msra.mxu0 0
    %1680 = vmatpush.bf16.msra.mxu0 0
    %1681 = vmatpush.bf16.msra.mxu0 0
    %1682 = vmatpush.bf16.msra.mxu0 %v215
    %1683 = vmatpush.bf16.msra.mxu0 %v201
    %1684 = vmatpush.bf16.msra.mxu0 %v200
    %1685 = vmatmul.bf16.gmra.mxu0 %v1669
    %v1686 = vpop.f32.mrf.mxu0
    %v1687 = vadd.f32 %v104, %v1686
    %v1688 = vpop.f32.mrf.mxu0
    %v1689 = vadd.f32 %v106, %v1688
    %1690 = vmatmul.bf16.gmra.mxu0 %v1672
    %v1691 = vpop.f32.mrf.mxu0
    %v1692 = vadd.f32 %v109, %v1691
    %v1693 = vpop.f32.mrf.mxu0
    %v1694 = vadd.f32 %v111, %v1693
    %1695 = vmatmul.bf16.gmra.mxu0 %v1675
    %v1696 = vpop.f32.mrf.mxu0
    %v1697 = vadd.f32 %v114, %v1696
    %v1698 = vpop.f32.mrf.mxu0
    %v1699 = vadd.f32 %v116, %v1698
    %1700 = vdwg.mxu0
    %v1701 = vmax.f32 %v1687, 0.0
    %v1702 = vmax.f32 %v1689, 0.0
    %v1703 = vmax.f32 %v1692, 0.0
    %v1704 = vmax.f32 %v1694, 0.0
    %v1705 = vmax.f32 %v1697, 0.0
    %v1706 = vmax.f32 %v1699, 0.0
    %v1707 = vsel %vm247, %v1701, 0.0
    %1708 = vadd.xlane.f32.xlu0 %v1707
    %v1709 = vpop.xlane.xlu0 %1708
    %v1710 = vsel %vm247, %v1702, 0.0
    %1711 = vadd.xlane.f32.xlu0 %v1710
    %v1712 = vpop.xlane.xlu0 %1711
    %v1713 = vsel %vm247, %v1703, 0.0
    %1714 = vadd.xlane.f32.xlu0 %v1713
    %v1715 = vpop.xlane.xlu0 %1714
    %v1716 = vsel %vm247, %v1704, 0.0
    %1717 = vadd.xlane.f32.xlu0 %v1716
    %v1718 = vpop.xlane.xlu0 %1717
    %v1719 = vsel %vm247, %v1705, 0.0
    %1720 = vadd.xlane.f32.xlu0 %v1719
    %v1721 = vpop.xlane.xlu0 %1720
    %v1722 = vsel %vm247, %v1706, 0.0
    %1723 = vadd.xlane.f32.xlu0 %v1722
    %v1724 = vpop.xlane.xlu0 %1723
    %v1725 = vmul.f32 %v1709, %v272
    %v1726 = vmul.f32 %v1712, %v272
    %v1727 = vmul.f32 %v1715, %v272
    %v1728 = vmul.f32 %v1718, %v272
    %v1729 = vmul.f32 %v1721, %v272
    %v1730 = vmul.f32 %v1724, %v272
    %v1731 = vsub.f32 %v1701, %v1725
    %v1732 = vsub.f32 %v1702, %v1726
    %v1733 = vsub.f32 %v1703, %v1727
    %v1734 = vsub.f32 %v1704, %v1728
    %v1735 = vsub.f32 %v1705, %v1729
    %v1736 = vsub.f32 %v1706, %v1730
    %v1737 = vmul.f32 %v1731, %v1731
    %v1738 = vmul.f32 %v1732, %v1732
    %v1739 = vmul.f32 %v1733, %v1733
    %v1740 = vmul.f32 %v1734, %v1734
    %v1741 = vmul.f32 %v1735, %v1735
    %v1742 = vmul.f32 %v1736, %v1736
    %v1743 = vsel %vm247, %v1737, 0.0
    %1744 = vadd.xlane.f32.xlu0 %v1743
    %v1745 = vpop.xlane.xlu0 %1744
    %v1746 = vsel %vm247, %v1738, 0.0
    %1747 = vadd.xlane.f32.xlu0 %v1746
    %v1748 = vpop.xlane.xlu0 %1747
    %v1749 = vsel %vm247, %v1739, 0.0
    %1750 = vadd.xlane.f32.xlu0 %v1749
    %v1751 = vpop.xlane.xlu0 %1750
    %v1752 = vsel %vm247, %v1740, 0.0
    %1753 = vadd.xlane.f32.xlu0 %v1752
    %v1754 = vpop.xlane.xlu0 %1753
    %v1755 = vsel %vm247, %v1741, 0.0
    %1756 = vadd.xlane.f32.xlu0 %v1755
    %v1757 = vpop.xlane.xlu0 %1756
    %v1758 = vsel %vm247, %v1742, 0.0
    %1759 = vadd.xlane.f32.xlu0 %v1758
    %v1760 = vpop.xlane.xlu0 %1759
    %v1761 = vmul.f32 %v1745, %v272
    %v1762 = vmul.f32 %v1748, %v272
    %v1763 = vmul.f32 %v1751, %v272
    %v1764 = vmul.f32 %v1754, %v272
    %v1765 = vmul.f32 %v1757, %v272
    %v1766 = vmul.f32 %v1760, %v272
    %v1767 = vadd.f32 %v1761, 1e-05
    %v1768 = vadd.f32 %v1762, 1e-05
    %v1769 = vadd.f32 %v1763, 1e-05
    %v1770 = vadd.f32 %v1764, 1e-05
    %v1771 = vadd.f32 %v1765, 1e-05
    %v1772 = vadd.f32 %v1766, 1e-05
    %v1773 = vrsqrt.pop %v1767
    %v1774 = vmul.f32 %v1773, %v1767
    %v1775 = vmul.f32 %v1774, %v1773
    %v1776 = vmul.f32 0.5, %v1775
    %v1777 = vsub.f32 1.5, %v1776
    %v1778 = vmul.f32 %v1773, %v1777
    %vm1779 = vweird.f32 %v1767
    %vm1780 = vweird.f32 %v1773
    %vm1781 = vmor %vm1779, %vm1780
    %v1782 = vsel %vm1781, %v1773, %v1778
    %v1783 = vrsqrt.pop %v1768
    %v1784 = vmul.f32 %v1783, %v1768
    %v1785 = vmul.f32 %v1784, %v1783
    %v1786 = vmul.f32 0.5, %v1785
    %v1787 = vsub.f32 1.5, %v1786
    %v1788 = vmul.f32 %v1783, %v1787
    %vm1789 = vweird.f32 %v1768
    %vm1790 = vweird.f32 %v1783
    %vm1791 = vmor %vm1789, %vm1790
    %v1792 = vsel %vm1791, %v1783, %v1788
    %v1793 = vrsqrt.pop %v1769
    %v1794 = vmul.f32 %v1793, %v1769
    %v1795 = vmul.f32 %v1794, %v1793
    %v1796 = vmul.f32 0.5, %v1795
    %v1797 = vsub.f32 1.5, %v1796
    %v1798 = vmul.f32 %v1793, %v1797
    %vm1799 = vweird.f32 %v1769
    %vm1800 = vweird.f32 %v1793
    %vm1801 = vmor %vm1799, %vm1800
    %v1802 = vsel %vm1801, %v1793, %v1798
    %v1803 = vrsqrt.pop %v1770
    %v1804 = vmul.f32 %v1803, %v1770
    %v1805 = vmul.f32 %v1804, %v1803
    %v1806 = vmul.f32 0.5, %v1805
    %v1807 = vsub.f32 1.5, %v1806
    %v1808 = vmul.f32 %v1803, %v1807
    %vm1809 = vweird.f32 %v1770
    %vm1810 = vweird.f32 %v1803
    %vm1811 = vmor %vm1809, %vm1810
    %v1812 = vsel %vm1811, %v1803, %v1808
    %v1813 = vrsqrt.pop %v1771
    %v1814 = vmul.f32 %v1813, %v1771
    %v1815 = vmul.f32 %v1814, %v1813
    %v1816 = vmul.f32 0.5, %v1815
    %v1817 = vsub.f32 1.5, %v1816
    %v1818 = vmul.f32 %v1813, %v1817
    %vm1819 = vweird.f32 %v1771
    %vm1820 = vweird.f32 %v1813
    %vm1821 = vmor %vm1819, %vm1820
    %v1822 = vsel %vm1821, %v1813, %v1818
    %v1823 = vrsqrt.pop %v1772
    %v1824 = vmul.f32 %v1823, %v1772
    %v1825 = vmul.f32 %v1824, %v1823
    %v1826 = vmul.f32 0.5, %v1825
    %v1827 = vsub.f32 1.5, %v1826
    %v1828 = vmul.f32 %v1823, %v1827
    %vm1829 = vweird.f32 %v1772
    %vm1830 = vweird.f32 %v1823
    %vm1831 = vmor %vm1829, %vm1830
    %v1832 = vsel %vm1831, %v1823, %v1828
    %v1833 = vmul.f32 %v1731, %v1782
    %v1834 = vmul.f32 %v1732, %v1792
    %v1835 = vmul.f32 %v1733, %v1802
    %v1836 = vmul.f32 %v1734, %v1812
    %v1837 = vmul.f32 %v1735, %v1822
    %v1838 = vmul.f32 %v1736, %v1832
    %v1839 = vmul.f32 %v1833, %v388
    %v1840 = vmul.f32 %v1834, %v388
    %v1841 = vmul.f32 %v1835, %v388
    %v1842 = vmul.f32 %v1836, %v388
    %v1843 = vmul.f32 %v1837, %v388
    %v1844 = vmul.f32 %v1838, %v388
    %v1845 = vadd.f32 %v1610, %v1839
    %v1846 = vadd.f32 %v1611, %v1840
    %v1847 = vadd.f32 %v1612, %v1841
    %v1848 = vadd.f32 %v1613, %v1842
    %v1849 = vadd.f32 %v1614, %v1843
    %v1850 = vadd.f32 %v1615, %v1844
    %v1851 = vadd.f32 %v1845, %v403
    %v1852 = vadd.f32 %v1846, %v403
    %v1853 = vadd.f32 %v1847, %v403
    %v1854 = vadd.f32 %v1848, %v403
    %v1855 = vadd.f32 %v1849, %v403
    %v1856 = vadd.f32 %v1850, %v403
    %s1857 = scalar_lea.vmem %s0, 336
    %v1858 = vld [vmem:[%s1857] sm:$0xff]
    %v1859 = vld [vmem:[%s1857 + $0x8] sm:$0xff]
    %v1860 = vld [vmem:[%s1857 + $0x10] sm:$0xff]
    %v1861 = vld [vmem:[%s1857 + $0x18] sm:$0xff]
    %v1862 = vld [vmem:[%s1857 + $0x20] sm:$0xff]
    %v1863 = vld [vmem:[%s1857 + $0x28] sm:$0xff]
    %v1864 = vsub.f32 %v1858, %v34
    %v1865 = vsub.f32 %v1859, %v35
    %v1866 = vsub.f32 %v1860, %v36
    %v1867 = vsub.f32 %v1861, %v37
    %v1868 = vsub.f32 %v1862, %v38
    %v1869 = vsub.f32 %v1863, %v39
    %v1870 = vpack.c.bf16 %v1865, %v1864
    %v1871 = vpack.c.bf16 %v1867, %v1866
    %v1872 = vpack.c.bf16 %v1869, %v1868
    %v1874 = vsel %vm80, %v1870, 0
    %v1877 = vsel %vm80, %v1871, 0
    %v1880 = vsel %vm80, %v1872, 0
    %1882 = vmatpush.bf16.msra.mxu0 0
    %1883 = vmatpush.bf16.msra.mxu0 0
    %1884 = vmatpush.bf16.msra.mxu0 0
    %1885 = vmatpush.bf16.msra.mxu0 0
    %1886 = vmatpush.bf16.msra.mxu0 0
    %1887 = vmatpush.bf16.msra.mxu0 %v161
    %1888 = vmatpush.bf16.msra.mxu0 %v147
    %1889 = vmatpush.bf16.msra.mxu0 %v146
    %1890 = vmatmul.bf16.gmra.mxu0 %v1874
    %v1891 = vpop.f32.mrf.mxu0
    %v1892 = vadd.f32 %v134, %v1891
    %v1893 = vpop.f32.mrf.mxu0
    %v1894 = vadd.f32 %v134, %v1893
    %1895 = vmatmul.bf16.gmra.mxu0 %v1877
    %v1896 = vpop.f32.mrf.mxu0
    %v1897 = vadd.f32 %v134, %v1896
    %v1898 = vpop.f32.mrf.mxu0
    %v1899 = vadd.f32 %v134, %v1898
    %1900 = vmatmul.bf16.gmra.mxu0 %v1880
    %v1901 = vpop.f32.mrf.mxu0
    %v1902 = vadd.f32 %v134, %v1901
    %v1903 = vpop.f32.mrf.mxu0
    %v1904 = vadd.f32 %v134, %v1903
    %1905 = vdwg.mxu0
    %v1906 = vpack.c.bf16 %v1894, %v1892
    %v1907 = vpack.c.bf16 %v1899, %v1897
    %v1908 = vpack.c.bf16 %v1904, %v1902
    %v1910 = vsel %vm80, %v1906, 0
    %v1913 = vsel %vm80, %v1907, 0
    %v1916 = vsel %vm80, %v1908, 0
    %1918 = vmatpush.bf16.msra.mxu0 0
    %1919 = vmatpush.bf16.msra.mxu0 0
    %1920 = vmatpush.bf16.msra.mxu0 0
    %1921 = vmatpush.bf16.msra.mxu0 0
    %1922 = vmatpush.bf16.msra.mxu0 0
    %1923 = vmatpush.bf16.msra.mxu0 %v215
    %1924 = vmatpush.bf16.msra.mxu0 %v201
    %1925 = vmatpush.bf16.msra.mxu0 %v200
    %1926 = vmatmul.bf16.gmra.mxu0 %v1910
    %v1927 = vpop.f32.mrf.mxu0
    %v1928 = vadd.f32 %v104, %v1927
    %v1929 = vpop.f32.mrf.mxu0
    %v1930 = vadd.f32 %v106, %v1929
    %1931 = vmatmul.bf16.gmra.mxu0 %v1913
    %v1932 = vpop.f32.mrf.mxu0
    %v1933 = vadd.f32 %v109, %v1932
    %v1934 = vpop.f32.mrf.mxu0
    %v1935 = vadd.f32 %v111, %v1934
    %1936 = vmatmul.bf16.gmra.mxu0 %v1916
    %v1937 = vpop.f32.mrf.mxu0
    %v1938 = vadd.f32 %v114, %v1937
    %v1939 = vpop.f32.mrf.mxu0
    %v1940 = vadd.f32 %v116, %v1939
    %1941 = vdwg.mxu0
    %v1942 = vmax.f32 %v1928, 0.0
    %v1943 = vmax.f32 %v1930, 0.0
    %v1944 = vmax.f32 %v1933, 0.0
    %v1945 = vmax.f32 %v1935, 0.0
    %v1946 = vmax.f32 %v1938, 0.0
    %v1947 = vmax.f32 %v1940, 0.0
    %v1948 = vsel %vm247, %v1942, 0.0
    %1949 = vadd.xlane.f32.xlu0 %v1948
    %v1950 = vpop.xlane.xlu0 %1949
    %v1951 = vsel %vm247, %v1943, 0.0
    %1952 = vadd.xlane.f32.xlu0 %v1951
    %v1953 = vpop.xlane.xlu0 %1952
    %v1954 = vsel %vm247, %v1944, 0.0
    %1955 = vadd.xlane.f32.xlu0 %v1954
    %v1956 = vpop.xlane.xlu0 %1955
    %v1957 = vsel %vm247, %v1945, 0.0
    %1958 = vadd.xlane.f32.xlu0 %v1957
    %v1959 = vpop.xlane.xlu0 %1958
    %v1960 = vsel %vm247, %v1946, 0.0
    %1961 = vadd.xlane.f32.xlu0 %v1960
    %v1962 = vpop.xlane.xlu0 %1961
    %v1963 = vsel %vm247, %v1947, 0.0
    %1964 = vadd.xlane.f32.xlu0 %v1963
    %v1965 = vpop.xlane.xlu0 %1964
    %v1966 = vmul.f32 %v1950, %v272
    %v1967 = vmul.f32 %v1953, %v272
    %v1968 = vmul.f32 %v1956, %v272
    %v1969 = vmul.f32 %v1959, %v272
    %v1970 = vmul.f32 %v1962, %v272
    %v1971 = vmul.f32 %v1965, %v272
    %v1972 = vsub.f32 %v1942, %v1966
    %v1973 = vsub.f32 %v1943, %v1967
    %v1974 = vsub.f32 %v1944, %v1968
    %v1975 = vsub.f32 %v1945, %v1969
    %v1976 = vsub.f32 %v1946, %v1970
    %v1977 = vsub.f32 %v1947, %v1971
    %v1978 = vmul.f32 %v1972, %v1972
    %v1979 = vmul.f32 %v1973, %v1973
    %v1980 = vmul.f32 %v1974, %v1974
    %v1981 = vmul.f32 %v1975, %v1975
    %v1982 = vmul.f32 %v1976, %v1976
    %v1983 = vmul.f32 %v1977, %v1977
    %v1984 = vsel %vm247, %v1978, 0.0
    %1985 = vadd.xlane.f32.xlu0 %v1984
    %v1986 = vpop.xlane.xlu0 %1985
    %v1987 = vsel %vm247, %v1979, 0.0
    %1988 = vadd.xlane.f32.xlu0 %v1987
    %v1989 = vpop.xlane.xlu0 %1988
    %v1990 = vsel %vm247, %v1980, 0.0
    %1991 = vadd.xlane.f32.xlu0 %v1990
    %v1992 = vpop.xlane.xlu0 %1991
    %v1993 = vsel %vm247, %v1981, 0.0
    %1994 = vadd.xlane.f32.xlu0 %v1993
    %v1995 = vpop.xlane.xlu0 %1994
    %v1996 = vsel %vm247, %v1982, 0.0
    %1997 = vadd.xlane.f32.xlu0 %v1996
    %v1998 = vpop.xlane.xlu0 %1997
    %v1999 = vsel %vm247, %v1983, 0.0
    %2000 = vadd.xlane.f32.xlu0 %v1999
    %v2001 = vpop.xlane.xlu0 %2000
    %v2002 = vmul.f32 %v1986, %v272
    %v2003 = vmul.f32 %v1989, %v272
    %v2004 = vmul.f32 %v1992, %v272
    %v2005 = vmul.f32 %v1995, %v272
    %v2006 = vmul.f32 %v1998, %v272
    %v2007 = vmul.f32 %v2001, %v272
    %v2008 = vadd.f32 %v2002, 1e-05
    %v2009 = vadd.f32 %v2003, 1e-05
    %v2010 = vadd.f32 %v2004, 1e-05
    %v2011 = vadd.f32 %v2005, 1e-05
    %v2012 = vadd.f32 %v2006, 1e-05
    %v2013 = vadd.f32 %v2007, 1e-05
    %v2014 = vrsqrt.pop %v2008
    %v2015 = vmul.f32 %v2014, %v2008
    %v2016 = vmul.f32 %v2015, %v2014
    %v2017 = vmul.f32 0.5, %v2016
    %v2018 = vsub.f32 1.5, %v2017
    %v2019 = vmul.f32 %v2014, %v2018
    %vm2020 = vweird.f32 %v2008
    %vm2021 = vweird.f32 %v2014
    %vm2022 = vmor %vm2020, %vm2021
    %v2023 = vsel %vm2022, %v2014, %v2019
    %v2024 = vrsqrt.pop %v2009
    %v2025 = vmul.f32 %v2024, %v2009
    %v2026 = vmul.f32 %v2025, %v2024
    %v2027 = vmul.f32 0.5, %v2026
    %v2028 = vsub.f32 1.5, %v2027
    %v2029 = vmul.f32 %v2024, %v2028
    %vm2030 = vweird.f32 %v2009
    %vm2031 = vweird.f32 %v2024
    %vm2032 = vmor %vm2030, %vm2031
    %v2033 = vsel %vm2032, %v2024, %v2029
    %v2034 = vrsqrt.pop %v2010
    %v2035 = vmul.f32 %v2034, %v2010
    %v2036 = vmul.f32 %v2035, %v2034
    %v2037 = vmul.f32 0.5, %v2036
    %v2038 = vsub.f32 1.5, %v2037
    %v2039 = vmul.f32 %v2034, %v2038
    %vm2040 = vweird.f32 %v2010
    %vm2041 = vweird.f32 %v2034
    %vm2042 = vmor %vm2040, %vm2041
    %v2043 = vsel %vm2042, %v2034, %v2039
    %v2044 = vrsqrt.pop %v2011
    %v2045 = vmul.f32 %v2044, %v2011
    %v2046 = vmul.f32 %v2045, %v2044
    %v2047 = vmul.f32 0.5, %v2046
    %v2048 = vsub.f32 1.5, %v2047
    %v2049 = vmul.f32 %v2044, %v2048
    %vm2050 = vweird.f32 %v2011
    %vm2051 = vweird.f32 %v2044
    %vm2052 = vmor %vm2050, %vm2051
    %v2053 = vsel %vm2052, %v2044, %v2049
    %v2054 = vrsqrt.pop %v2012
    %v2055 = vmul.f32 %v2054, %v2012
    %v2056 = vmul.f32 %v2055, %v2054
    %v2057 = vmul.f32 0.5, %v2056
    %v2058 = vsub.f32 1.5, %v2057
    %v2059 = vmul.f32 %v2054, %v2058
    %vm2060 = vweird.f32 %v2012
    %vm2061 = vweird.f32 %v2054
    %vm2062 = vmor %vm2060, %vm2061
    %v2063 = vsel %vm2062, %v2054, %v2059
    %v2064 = vrsqrt.pop %v2013
    %v2065 = vmul.f32 %v2064, %v2013
    %v2066 = vmul.f32 %v2065, %v2064
    %v2067 = vmul.f32 0.5, %v2066
    %v2068 = vsub.f32 1.5, %v2067
    %v2069 = vmul.f32 %v2064, %v2068
    %vm2070 = vweird.f32 %v2013
    %vm2071 = vweird.f32 %v2064
    %vm2072 = vmor %vm2070, %vm2071
    %v2073 = vsel %vm2072, %v2064, %v2069
    %v2074 = vmul.f32 %v1972, %v2023
    %v2075 = vmul.f32 %v1973, %v2033
    %v2076 = vmul.f32 %v1974, %v2043
    %v2077 = vmul.f32 %v1975, %v2053
    %v2078 = vmul.f32 %v1976, %v2063
    %v2079 = vmul.f32 %v1977, %v2073
    %v2080 = vmul.f32 %v2074, %v388
    %v2081 = vmul.f32 %v2075, %v388
    %v2082 = vmul.f32 %v2076, %v388
    %v2083 = vmul.f32 %v2077, %v388
    %v2084 = vmul.f32 %v2078, %v388
    %v2085 = vmul.f32 %v2079, %v388
    %v2086 = vadd.f32 %v1851, %v2080
    %v2087 = vadd.f32 %v1852, %v2081
    %v2088 = vadd.f32 %v1853, %v2082
    %v2089 = vadd.f32 %v1854, %v2083
    %v2090 = vadd.f32 %v1855, %v2084
    %v2091 = vadd.f32 %v1856, %v2085
    %v2092 = vadd.f32 %v2086, %v403
    %v2093 = vadd.f32 %v2087, %v403
    %v2094 = vadd.f32 %v2088, %v403
    %v2095 = vadd.f32 %v2089, %v403
    %v2096 = vadd.f32 %v2090, %v403
    %v2097 = vadd.f32 %v2091, %v403
    %v2098 = vmul.f32 %v2092, 0.125
    %v2099 = vmul.f32 %v2093, 0.125
    %v2100 = vmul.f32 %v2094, 0.125
    %v2101 = vmul.f32 %v2095, 0.125
    %v2102 = vmul.f32 %v2096, 0.125
    %v2103 = vmul.f32 %v2097, 0.125
    %2104 = vst.msk [vmem:[#allocation2] sm:$0xff] %vm247, %v2098
    %2105 = vst.msk [vmem:[#allocation2 + $0x8] sm:$0xff] %vm247, %v2099
    %2106 = vst.msk [vmem:[#allocation2 + $0x10] sm:$0xff] %vm247, %v2100
    %2107 = vst.msk [vmem:[#allocation2 + $0x18] sm:$0xff] %vm247, %v2101
    %2108 = vst.msk [vmem:[#allocation2 + $0x20] sm:$0xff] %vm247, %v2102
    %2109 = vst.msk [vmem:[#allocation2 + $0x28] sm:$0xff] %vm247, %v2103
    // Predicated region
    $region38: #{_stage_step.1} parent=1 // pred_check
      _
    $region39: #{_stage_step.1} parent=1 // pred_check_branch
      %2111 = sbr.rel (0) target = $region41
    $region40: #{_stage_step.1} parent=1 // pred_region
      %2113 = vsyncadd [#allocation3], 0
      %s2114 = sshll.u32 [#allocation2], 4
      %s2115 = int_to_ptr.vmem [resolvable:$true] %s2114
      %s2116 = sshll.u32 %s9, 4
      %s2117 = int_to_ptr.hbm [resolvable:$true] %s2116
      %2122 = dma.vmem_to_hbm [thread:$0]  %s2115, 768, %s2117, [#allocation3], 128, 128, 8
    $region41: #{_stage_step.1} parent=1 // pred_fallthru
      _
    // Predicated region
    $region42: #{_stage_step.1} parent=1 // pred_check
      _
    $region43: #{_stage_step.1} parent=1 // pred_check_branch
      %2124 = sbr.rel (0) target = $region45
    $region44: #{_stage_step.1} parent=1 // pred_region
      %2126 = dma.done [#allocation3], 768
    $region45: #{_stage_step.1} parent=1 // pred_fallthru
      _
    %2127 = vsyncpa [#allocation3], 1

</llo_original>
